<compile_context>
chip_gen: v5e
topology: v5e:2x2
jax: 0.10.0
libtpu: 0.0.40
codegen_flags: <defaults>
</compile_context>

<pallas_src>
from functools import partial

import numpy as np
import jax
import jax.numpy as jnp
from jax.experimental import pallas as pl
from jax.experimental.pallas import tpu as pltpu


# ----------------------------------------------------------------------------
# Parameter init (deterministic, glorot_orthogonal-equivalent)
# ----------------------------------------------------------------------------
def glorot_orthogonal(key, shape, scale=2.0, dtype=jnp.float32):
    """Orthogonal init on the flattened (d0, d1*d2) matrix, rescaled so that
    var(W) = scale / (fan_in + fan_out) — same semantics as DimeNet's helper."""
    emb_size, interm, units_out = shape
    w = jax.nn.initializers.orthogonal()(key, (emb_size, interm * units_out), dtype)
    w = w.reshape(shape)
    fan_in = interm * units_out
    fan_out = emb_size * units_out
    w = w * jnp.sqrt(scale / ((fan_in + fan_out) * jnp.var(w)))
    return w


# ----------------------------------------------------------------------------
# Pallas kernel (E-last layout: last dim of every per-edge tile is block_e lanes)
# ----------------------------------------------------------------------------
def _bilinear_kernel(sph_ref, m2_ref, rbf_ref, w_ref, out_ref, *, matmul_dtype):
    f32 = jnp.float32
    sph = sph_ref[...].astype(f32)   # (S, K, BE)
    m2 = m2_ref[...].astype(f32)     # (K, C, BE)
    rbf = rbf_ref[...].astype(f32)   # (I, S, BE)

    S, K, BE = sph.shape
    C = m2.shape[1]
    I = rbf.shape[0]

    # (1) rs[k,i,e] = sum_s rbf[e,i,s] * sph[e,s,k]
    #     Shallow contraction over S: 128-lane VPU FMAs; sph[s] is a cheap
    #     leading-dim slice, rbf[:, s, :] a sublane extraction.
    # NOTE: S/K are small for this module; for large Kmax switch these static
    # Python unrolls to lax.fori_loop(..., unroll=True) to bound vreg pressure.
    rs = jnp.zeros((K, I, BE), f32)
    for s in range(S):
        rs = rs + sph[s][:, None, :] * rbf[:, s, :][None, :, :]

    # (2) t[i,c,e] = sum_k rs[k,i,e] * m2[e,k,c]
    #     Both rs[k] and m2[k] are leading-dim slices (no sublane extraction).
    t = jnp.zeros((I, C, BE), f32)
    for k in range(K):
        t = t + rs[k][:, None, :] * m2[k][None, :, :]

    # (3) out[u,e] = sum_{i,c} w2d[u, i*C + c] * t[i,c,e]
    #     (I, C, BE) -> (I*C, BE) is a free tile relabel (C multiple of 8);
    #     single lane-dense MXU matmul against the VMEM-resident weight.
    t2d = t.reshape(I * C, BE).astype(matmul_dtype)
    out_ref[...] = jnp.dot(
        w_ref[...], t2d, preferred_element_type=jnp.float32
    ).astype(out_ref.dtype)


# ----------------------------------------------------------------------------
# Wrapper
# ----------------------------------------------------------------------------
def efficient_interaction_bilinear(rbf_W1, sph, m, id_reduce, id_ragged_idx, weight,
                                   *, Kmax, block_e=128,
                                   compute_dtype=jnp.float32,
                                   buffer_count=None):
    """Forward pass of EfficientInteractionBilinear.

    Kmax must be a static Python int (the PyTorch module computes it host-side
    via .item() anyway) so this wrapper stays jittable.

    compute_dtype=jnp.bfloat16 is recommended on all TPU generations (including
    v5e): the kernel is memory-bound, and accumulation stays f32 in-kernel.
    block_e: 128 default; 256-512 pays off on v6e at large E.  On v7x keep the
    number of grid steps even so both TensorCores are used.
    buffer_count: optional deeper input pipelining (e.g. 3 on v5e).
    """
    E, I, S = rbf_W1.shape
    C = m.shape[-1]
    Cw, Iw, U = weight.shape
    assert Cw == C and Iw == I
    assert sph.shape == (E, S, Kmax)

    cd = jnp.dtype(compute_dtype)
    if E == 0 or Kmax == 0:
        return jnp.zeros((E, U), cd)

    U_pad = pl.cdiv(U, 128) * 128           # lane-dense output -> unmasked stores
    E_pad = pl.cdiv(E, block_e) * block_e   # pad E instead of asserting divisibility

    # --- E-last layout --------------------------------------------------------
    # Ragged scatter straight into the transposed (Kmax, C, E_pad) layout so the
    # largest operand is written once, already in kernel layout.
    # (Same duplicate-pair caveat as the PyTorch indexed assignment.)
    # TODO(synk): fuse this densification into the kernel via scalar-prefetched
    # per-block row offsets + DMA gather of contiguous m row ranges.
    m2_t = (jnp.zeros((Kmax, C, E_pad), cd)
            .at[id_ragged_idx, :, id_reduce].set(m.astype(cd)))

    # One transpose per dense input with the E lane-pad folded in; no S/K padding
    # (block last-two dims equal the full array dims, and the kernel loops over
    # the true S / Kmax).
    epad = ((0, 0), (0, 0), (0, E_pad - E))
    sph_t = jnp.pad(jnp.transpose(sph.astype(cd), (1, 2, 0)), epad)     # (S, K, E_pad)
    rbf_t = jnp.pad(jnp.transpose(rbf_W1.astype(cd), (1, 2, 0)), epad)  # (I, S, E_pad)

    # weight (C, I, U) -> (U_pad, I*C): flattened + padded ONCE outside the
    # kernel; constant index_map keeps it resident in VMEM across grid steps.
    w2d = jnp.transpose(weight, (2, 1, 0)).reshape(U, I * C).astype(cd)
    w2d = jnp.pad(w2d, ((0, U_pad - U), (0, 0)))

    def edge_spec(shape):
        kwargs = {}
        if buffer_count is not None:
            kwargs["pipeline_mode"] = pl.Buffered(buffer_count)
        return pl.BlockSpec(shape, lambda e: (0, 0, e), **kwargs)

    grid = (E_pad // block_e,)   # keep >= 2 (ideally even) steps so v7x uses both TCs

    out = pl.pallas_call(
        partial(_bilinear_kernel, matmul_dtype=cd),
        out_shape=jax.ShapeDtypeStruct((U_pad, E_pad), cd),
        grid_spec=pltpu.PrefetchScalarGridSpec(
            num_scalar_prefetch=0,
            grid=grid,
            in_specs=[
                edge_spec((S, Kmax, block_e)),                      # sph  (S, K, E)
                edge_spec((Kmax, C, block_e)),                      # m2   (K, C, E)
                edge_spec((I, S, block_e)),                         # rbf  (I, S, E)
                pl.BlockSpec((U_pad, I * C), lambda e: (0, 0)),     # flat weight
            ],
            out_specs=pl.BlockSpec((U_pad, block_e), lambda e: (0, e)),
        ),
        compiler_params=pltpu.CompilerParams(
            dimension_semantics=("parallel",),
            vmem_limit_bytes=32 * 1024 * 1024,
        ),
    )(sph_t, m2_t, rbf_t, w2d)

    # (U_pad, E_pad) -> (E, U): single slice + transpose on the small output.
    return out[:U, :E].T


# ----------------------------------------------------------------------------
# Pure-JAX reference (mirrors the PyTorch forward exactly)
# ----------------------------------------------------------------------------
def reference(rbf_W1, sph, m, id_reduce, id_ragged_idx, weight, Kmax):
    E = rbf_W1.shape[0]
    C = m.shape[-1]
    hi = jax.lax.Precision.HIGHEST
    m2 = jnp.zeros((E, Kmax, C), m.dtype).at[id_reduce, id_ragged_idx].set(m)
    sum_k = jnp.einsum("esk,ekc->esc", sph, m2, precision=hi)        # (E, S, C)
    t = jnp.einsum("eis,esc->eic", rbf_W1, sum_k, precision=hi)      # (E, I, C)
    m_st = jnp.einsum("eic,ciu->eu", t, weight, precision=hi)        # sum over c, i
    return m_st


if __name__ == "__main__":
    # Shapes implied by the module:
    #   E edges, S num_spherical, C emb_size, I emb_size_interm, U units_out
    E, S, C, I, U = 200, 7, 32, 16, 24

    key = jax.random.PRNGKey(0)
    k_rbf, k_sph, k_m, k_w = jax.random.split(key, 4)

    # deterministic ragged structure: edge e has (e % 4) + 1 triplets
    counts = (np.arange(E) % 4) + 1                    # Kmax = 4, T = 500
    T = int(counts.sum())
    Kmax = int(counts.max())
    id_reduce = jnp.asarray(np.repeat(np.arange(E), counts), jnp.int32)
    id_ragged_idx = jnp.asarray(
        np.concatenate([np.arange(c) for c in counts]), jnp.int32)

    rbf_W1 = jax.random.normal(k_rbf, (E, I, S), jnp.float32)
    sph = jax.random.normal(k_sph, (E, S, Kmax), jnp.float32)
    m = jax.random.normal(k_m, (T, C), jnp.float32)
    weight = glorot_orthogonal(k_w, (C, I, U), scale=2.0)

    fwd = jax.jit(efficient_interaction_bilinear,
                  static_argnames=("Kmax", "block_e", "compute_dtype",
                                   "buffer_count"))

    # ---- f32 path (exact semantics of the PyTorch module) ----
    out = fwd(rbf_W1, sph, m, id_reduce, id_ragged_idx, weight,
              Kmax=Kmax, block_e=128)
    out = jax.block_until_ready(out)
    assert out.shape == (E, U), out.shape

    ref = reference(rbf_W1, sph, m, id_reduce, id_ragged_idx, weight, Kmax)
    np.testing.assert_allclose(np.asarray(out), np.asarray(ref),
                               rtol=1e-3, atol=1e-3)

    # ---- bf16 storage / MXU path (recommended on v5e/v6e/v7x), f32 accumulation ----
    out_bf16 = fwd(rbf_W1, sph, m, id_reduce, id_ragged_idx, weight,
                   Kmax=Kmax, block_e=128, compute_dtype=jnp.bfloat16)
    out_bf16 = jax.block_until_ready(out_bf16)
    bf = lambda x: x.astype(jnp.bfloat16).astype(jnp.float32)
    ref_bf = reference(bf(rbf_W1), bf(sph), bf(m), id_reduce, id_ragged_idx,
                       bf(weight), Kmax)
    np.testing.assert_allclose(np.asarray(out_bf16.astype(jnp.float32)),
                               np.asarray(ref_bf), rtol=1e-1, atol=2e-1)

    print("KERNEL_OK")
</pallas_src>

<mosaic_0001>
module attributes {stable_mosaic.version = 11 : i64} {
  func.func @_bilinear_kernel(%arg0: i32, %arg1: memref<7x4x128xf32, #tpu.memory_space<vmem>>, %arg2: memref<4x32x128xf32, #tpu.memory_space<vmem>>, %arg3: memref<16x7x128xf32, #tpu.memory_space<vmem>>, %arg4: memref<128x512xf32, #tpu.memory_space<vmem>>, %arg5: memref<128x128xf32, #tpu.memory_space<vmem>>) attributes {dimension_semantics = [#tpu.dimension_semantics<parallel>], iteration_bounds = array<i64: 2>, scalar_prefetch = 0 : i64, scratch_operands = 0 : i64, tpu.core_type = #tpu.core_type<tc>, window_params = [{transform_indices = @transform_0, window_bounds = array<i64: 7, 4, 128>}, {transform_indices = @transform_1, window_bounds = array<i64: 4, 32, 128>}, {transform_indices = @transform_2, window_bounds = array<i64: 16, 7, 128>}, {pipeline_mode = #tpu.pipeline_mode<synchronous>, transform_indices = @transform_3, window_bounds = array<i64: 128, 512>}, {transform_indices = @transform_4, window_bounds = array<i64: 128, 128>}]} {
    %c0 = arith.constant 0 : index
    %c0_0 = arith.constant 0 : index
    %c0_1 = arith.constant 0 : index
    %0 = vector.load %arg1[%c0, %c0_0, %c0_1] : memref<7x4x128xf32, #tpu.memory_space<vmem>>, vector<7x4x128xf32>
    %c0_2 = arith.constant 0 : index
    %c0_3 = arith.constant 0 : index
    %c0_4 = arith.constant 0 : index
    %1 = vector.load %arg2[%c0_2, %c0_3, %c0_4] : memref<4x32x128xf32, #tpu.memory_space<vmem>>, vector<4x32x128xf32>
    %c0_5 = arith.constant 0 : index
    %c0_6 = arith.constant 0 : index
    %c0_7 = arith.constant 0 : index
    %2 = vector.load %arg3[%c0_5, %c0_6, %c0_7] : memref<16x7x128xf32, #tpu.memory_space<vmem>>, vector<16x7x128xf32>
    %cst = arith.constant 0.000000e+00 : f32
    %3 = vector.broadcast %cst : f32 to vector<4x16x128xf32>
    %4 = vector.extract_strided_slice %0 {offsets = [0, 0, 0], sizes = [1, 4, 128], strides = [1, 1, 1]} : vector<7x4x128xf32> to vector<1x4x128xf32>
    %5 = vector.shape_cast %4 : vector<1x4x128xf32> to vector<4x128xf32>
    %6 = vector.shape_cast %5 : vector<4x128xf32> to vector<4x1x128xf32>
    %7 = vector.extract_strided_slice %2 {offsets = [0, 0, 0], sizes = [16, 1, 128], strides = [1, 1, 1]} : vector<16x7x128xf32> to vector<16x1x128xf32>
    %8 = vector.shape_cast %7 : vector<16x1x128xf32> to vector<16x128xf32>
    %9 = vector.shape_cast %8 : vector<16x128xf32> to vector<1x16x128xf32>
    %10 = vector.broadcast %6 : vector<4x1x128xf32> to vector<4x16x128xf32>
    %11 = vector.broadcast %9 : vector<1x16x128xf32> to vector<4x16x128xf32>
    %12 = arith.mulf %10, %11 : vector<4x16x128xf32>
    %13 = arith.addf %3, %12 : vector<4x16x128xf32>
    %14 = vector.extract_strided_slice %0 {offsets = [1, 0, 0], sizes = [1, 4, 128], strides = [1, 1, 1]} : vector<7x4x128xf32> to vector<1x4x128xf32>
    %15 = vector.shape_cast %14 : vector<1x4x128xf32> to vector<4x128xf32>
    %16 = vector.shape_cast %15 : vector<4x128xf32> to vector<4x1x128xf32>
    %17 = vector.extract_strided_slice %2 {offsets = [0, 1, 0], sizes = [16, 1, 128], strides = [1, 1, 1]} : vector<16x7x128xf32> to vector<16x1x128xf32>
    %18 = vector.shape_cast %17 : vector<16x1x128xf32> to vector<16x128xf32>
    %19 = vector.shape_cast %18 : vector<16x128xf32> to vector<1x16x128xf32>
    %20 = vector.broadcast %16 : vector<4x1x128xf32> to vector<4x16x128xf32>
    %21 = vector.broadcast %19 : vector<1x16x128xf32> to vector<4x16x128xf32>
    %22 = arith.mulf %20, %21 : vector<4x16x128xf32>
    %23 = arith.addf %13, %22 : vector<4x16x128xf32>
    %24 = vector.extract_strided_slice %0 {offsets = [2, 0, 0], sizes = [1, 4, 128], strides = [1, 1, 1]} : vector<7x4x128xf32> to vector<1x4x128xf32>
    %25 = vector.shape_cast %24 : vector<1x4x128xf32> to vector<4x128xf32>
    %26 = vector.shape_cast %25 : vector<4x128xf32> to vector<4x1x128xf32>
    %27 = vector.extract_strided_slice %2 {offsets = [0, 2, 0], sizes = [16, 1, 128], strides = [1, 1, 1]} : vector<16x7x128xf32> to vector<16x1x128xf32>
    %28 = vector.shape_cast %27 : vector<16x1x128xf32> to vector<16x128xf32>
    %29 = vector.shape_cast %28 : vector<16x128xf32> to vector<1x16x128xf32>
    %30 = vector.broadcast %26 : vector<4x1x128xf32> to vector<4x16x128xf32>
    %31 = vector.broadcast %29 : vector<1x16x128xf32> to vector<4x16x128xf32>
    %32 = arith.mulf %30, %31 : vector<4x16x128xf32>
    %33 = arith.addf %23, %32 : vector<4x16x128xf32>
    %34 = vector.extract_strided_slice %0 {offsets = [3, 0, 0], sizes = [1, 4, 128], strides = [1, 1, 1]} : vector<7x4x128xf32> to vector<1x4x128xf32>
    %35 = vector.shape_cast %34 : vector<1x4x128xf32> to vector<4x128xf32>
    %36 = vector.shape_cast %35 : vector<4x128xf32> to vector<4x1x128xf32>
    %37 = vector.extract_strided_slice %2 {offsets = [0, 3, 0], sizes = [16, 1, 128], strides = [1, 1, 1]} : vector<16x7x128xf32> to vector<16x1x128xf32>
    %38 = vector.shape_cast %37 : vector<16x1x128xf32> to vector<16x128xf32>
    %39 = vector.shape_cast %38 : vector<16x128xf32> to vector<1x16x128xf32>
    %40 = vector.broadcast %36 : vector<4x1x128xf32> to vector<4x16x128xf32>
    %41 = vector.broadcast %39 : vector<1x16x128xf32> to vector<4x16x128xf32>
    %42 = arith.mulf %40, %41 : vector<4x16x128xf32>
    %43 = arith.addf %33, %42 : vector<4x16x128xf32>
    %44 = vector.extract_strided_slice %0 {offsets = [4, 0, 0], sizes = [1, 4, 128], strides = [1, 1, 1]} : vector<7x4x128xf32> to vector<1x4x128xf32>
    %45 = vector.shape_cast %44 : vector<1x4x128xf32> to vector<4x128xf32>
    %46 = vector.shape_cast %45 : vector<4x128xf32> to vector<4x1x128xf32>
    %47 = vector.extract_strided_slice %2 {offsets = [0, 4, 0], sizes = [16, 1, 128], strides = [1, 1, 1]} : vector<16x7x128xf32> to vector<16x1x128xf32>
    %48 = vector.shape_cast %47 : vector<16x1x128xf32> to vector<16x128xf32>
    %49 = vector.shape_cast %48 : vector<16x128xf32> to vector<1x16x128xf32>
    %50 = vector.broadcast %46 : vector<4x1x128xf32> to vector<4x16x128xf32>
    %51 = vector.broadcast %49 : vector<1x16x128xf32> to vector<4x16x128xf32>
    %52 = arith.mulf %50, %51 : vector<4x16x128xf32>
    %53 = arith.addf %43, %52 : vector<4x16x128xf32>
    %54 = vector.extract_strided_slice %0 {offsets = [5, 0, 0], sizes = [1, 4, 128], strides = [1, 1, 1]} : vector<7x4x128xf32> to vector<1x4x128xf32>
    %55 = vector.shape_cast %54 : vector<1x4x128xf32> to vector<4x128xf32>
    %56 = vector.shape_cast %55 : vector<4x128xf32> to vector<4x1x128xf32>
    %57 = vector.extract_strided_slice %2 {offsets = [0, 5, 0], sizes = [16, 1, 128], strides = [1, 1, 1]} : vector<16x7x128xf32> to vector<16x1x128xf32>
    %58 = vector.shape_cast %57 : vector<16x1x128xf32> to vector<16x128xf32>
    %59 = vector.shape_cast %58 : vector<16x128xf32> to vector<1x16x128xf32>
    %60 = vector.broadcast %56 : vector<4x1x128xf32> to vector<4x16x128xf32>
    %61 = vector.broadcast %59 : vector<1x16x128xf32> to vector<4x16x128xf32>
    %62 = arith.mulf %60, %61 : vector<4x16x128xf32>
    %63 = arith.addf %53, %62 : vector<4x16x128xf32>
    %64 = vector.extract_strided_slice %0 {offsets = [6, 0, 0], sizes = [1, 4, 128], strides = [1, 1, 1]} : vector<7x4x128xf32> to vector<1x4x128xf32>
    %65 = vector.shape_cast %64 : vector<1x4x128xf32> to vector<4x128xf32>
    %66 = vector.shape_cast %65 : vector<4x128xf32> to vector<4x1x128xf32>
    %67 = vector.extract_strided_slice %2 {offsets = [0, 6, 0], sizes = [16, 1, 128], strides = [1, 1, 1]} : vector<16x7x128xf32> to vector<16x1x128xf32>
    %68 = vector.shape_cast %67 : vector<16x1x128xf32> to vector<16x128xf32>
    %69 = vector.shape_cast %68 : vector<16x128xf32> to vector<1x16x128xf32>
    %70 = vector.broadcast %66 : vector<4x1x128xf32> to vector<4x16x128xf32>
    %71 = vector.broadcast %69 : vector<1x16x128xf32> to vector<4x16x128xf32>
    %72 = arith.mulf %70, %71 : vector<4x16x128xf32>
    %73 = arith.addf %63, %72 : vector<4x16x128xf32>
    %cst_8 = arith.constant 0.000000e+00 : f32
    %74 = vector.broadcast %cst_8 : f32 to vector<16x32x128xf32>
    %75 = vector.extract_strided_slice %73 {offsets = [0, 0, 0], sizes = [1, 16, 128], strides = [1, 1, 1]} : vector<4x16x128xf32> to vector<1x16x128xf32>
    %76 = vector.shape_cast %75 : vector<1x16x128xf32> to vector<16x128xf32>
    %77 = vector.shape_cast %76 : vector<16x128xf32> to vector<16x1x128xf32>
    %78 = vector.extract_strided_slice %1 {offsets = [0, 0, 0], sizes = [1, 32, 128], strides = [1, 1, 1]} : vector<4x32x128xf32> to vector<1x32x128xf32>
    %79 = vector.shape_cast %78 : vector<1x32x128xf32> to vector<32x128xf32>
    %80 = vector.shape_cast %79 : vector<32x128xf32> to vector<1x32x128xf32>
    %81 = vector.broadcast %77 : vector<16x1x128xf32> to vector<16x32x128xf32>
    %82 = vector.broadcast %80 : vector<1x32x128xf32> to vector<16x32x128xf32>
    %83 = arith.mulf %81, %82 : vector<16x32x128xf32>
    %84 = arith.addf %74, %83 : vector<16x32x128xf32>
    %85 = vector.extract_strided_slice %73 {offsets = [1, 0, 0], sizes = [1, 16, 128], strides = [1, 1, 1]} : vector<4x16x128xf32> to vector<1x16x128xf32>
    %86 = vector.shape_cast %85 : vector<1x16x128xf32> to vector<16x128xf32>
    %87 = vector.shape_cast %86 : vector<16x128xf32> to vector<16x1x128xf32>
    %88 = vector.extract_strided_slice %1 {offsets = [1, 0, 0], sizes = [1, 32, 128], strides = [1, 1, 1]} : vector<4x32x128xf32> to vector<1x32x128xf32>
    %89 = vector.shape_cast %88 : vector<1x32x128xf32> to vector<32x128xf32>
    %90 = vector.shape_cast %89 : vector<32x128xf32> to vector<1x32x128xf32>
    %91 = vector.broadcast %87 : vector<16x1x128xf32> to vector<16x32x128xf32>
    %92 = vector.broadcast %90 : vector<1x32x128xf32> to vector<16x32x128xf32>
    %93 = arith.mulf %91, %92 : vector<16x32x128xf32>
    %94 = arith.addf %84, %93 : vector<16x32x128xf32>
    %95 = vector.extract_strided_slice %73 {offsets = [2, 0, 0], sizes = [1, 16, 128], strides = [1, 1, 1]} : vector<4x16x128xf32> to vector<1x16x128xf32>
    %96 = vector.shape_cast %95 : vector<1x16x128xf32> to vector<16x128xf32>
    %97 = vector.shape_cast %96 : vector<16x128xf32> to vector<16x1x128xf32>
    %98 = vector.extract_strided_slice %1 {offsets = [2, 0, 0], sizes = [1, 32, 128], strides = [1, 1, 1]} : vector<4x32x128xf32> to vector<1x32x128xf32>
    %99 = vector.shape_cast %98 : vector<1x32x128xf32> to vector<32x128xf32>
    %100 = vector.shape_cast %99 : vector<32x128xf32> to vector<1x32x128xf32>
    %101 = vector.broadcast %97 : vector<16x1x128xf32> to vector<16x32x128xf32>
    %102 = vector.broadcast %100 : vector<1x32x128xf32> to vector<16x32x128xf32>
    %103 = arith.mulf %101, %102 : vector<16x32x128xf32>
    %104 = arith.addf %94, %103 : vector<16x32x128xf32>
    %105 = vector.extract_strided_slice %73 {offsets = [3, 0, 0], sizes = [1, 16, 128], strides = [1, 1, 1]} : vector<4x16x128xf32> to vector<1x16x128xf32>
    %106 = vector.shape_cast %105 : vector<1x16x128xf32> to vector<16x128xf32>
    %107 = vector.shape_cast %106 : vector<16x128xf32> to vector<16x1x128xf32>
    %108 = vector.extract_strided_slice %1 {offsets = [3, 0, 0], sizes = [1, 32, 128], strides = [1, 1, 1]} : vector<4x32x128xf32> to vector<1x32x128xf32>
    %109 = vector.shape_cast %108 : vector<1x32x128xf32> to vector<32x128xf32>
    %110 = vector.shape_cast %109 : vector<32x128xf32> to vector<1x32x128xf32>
    %111 = vector.broadcast %107 : vector<16x1x128xf32> to vector<16x32x128xf32>
    %112 = vector.broadcast %110 : vector<1x32x128xf32> to vector<16x32x128xf32>
    %113 = arith.mulf %111, %112 : vector<16x32x128xf32>
    %114 = arith.addf %104, %113 : vector<16x32x128xf32>
    %115 = vector.shape_cast %114 : vector<16x32x128xf32> to vector<512x128xf32>
    %c0_9 = arith.constant 0 : index
    %c0_10 = arith.constant 0 : index
    %116 = vector.load %arg4[%c0_9, %c0_10] : memref<128x512xf32, #tpu.memory_space<vmem>>, vector<128x512xf32>
    %cst_11 = arith.constant dense<0.000000e+00> : vector<128x128xf32>
    %117 = tpu.matmul %116, %115, %cst_11 {dimension_numbers = #tpu.dot_dimension_numbers<[1], [0], [0], [1], [0, 0, 1, 1], [], []>} : vector<128x512xf32>, vector<512x128xf32>, vector<128x128xf32> -> vector<128x128xf32>
    %c0_12 = arith.constant 0 : index
    %c0_13 = arith.constant 0 : index
    %118 = vector.load %arg5[%c0_12, %c0_13] : memref<128x128xf32, #tpu.memory_space<vmem>>, vector<128x128xf32>
    tpu.vector_store %arg5[%c0_12, %c0_13], %117 {strides = array<i32>} : memref<128x128xf32, #tpu.memory_space<vmem>>, vector<128x128xf32>,
    return
  }
  func.func @transform_0(%arg0: i32) -> (i32, i32, i32) {
    %c0_i32 = arith.constant 0 : i32
    %c0_i32_0 = arith.constant 0 : i32
    %c0_i32_1 = arith.constant 0 : i32
    return %c0_i32, %c0_i32_0, %arg0 : i32, i32, i32
  }
  func.func @transform_1(%arg0: i32) -> (i32, i32, i32) {
    %c0_i32 = arith.constant 0 : i32
    %c0_i32_0 = arith.constant 0 : i32
    %c0_i32_1 = arith.constant 0 : i32
    return %c0_i32, %c0_i32_0, %arg0 : i32, i32, i32
  }
  func.func @transform_2(%arg0: i32) -> (i32, i32, i32) {
    %c0_i32 = arith.constant 0 : i32
    %c0_i32_0 = arith.constant 0 : i32
    %c0_i32_1 = arith.constant 0 : i32
    return %c0_i32, %c0_i32_0, %arg0 : i32, i32, i32
  }
  func.func @transform_3(%arg0: i32) -> (i32, i32) {
    %c0_i32 = arith.constant 0 : i32
    %c0_i32_0 = arith.constant 0 : i32
    %c0_i32_1 = arith.constant 0 : i32
    return %c0_i32, %c0_i32_0 : i32, i32
  }
  func.func @transform_4(%arg0: i32) -> (i32, i32) {
    %c0_i32 = arith.constant 0 : i32
    %c0_i32_0 = arith.constant 0 : i32
    return %c0_i32, %arg0 : i32, i32
  }
}

</mosaic_0001>

<llo_original>
// kernel: efficient_interaction_bilinear.1
$region0: #{efficient_interaction_bilinear.1}
  #allocation0 [shape = 'u32[]', space=smem, size = 0x4, offset = 0x4, fixed_abs, tag = 'smem constant byte address 0x4 - core index']
  #allocation1 [shape = 'u32[72,128]{1,0:T(1,128)}', space=vmem, size = 0x9000, scoped, tag = 'internal scratch']
  %s0 = inlined_call_operand.vmem [shape: f32[7,4,256], index: 0, kind: input, shape index: {}]
  %s1 = inlined_call_operand.vmem [shape: f32[4,32,256], index: 1, kind: input, shape index: {}]
  %s2 = inlined_call_operand.vmem [shape: f32[16,7,256], index: 2, kind: input, shape index: {}]
  %s3 = inlined_call_operand.vmem [shape: f32[128,512], index: 3, kind: input, shape index: {}]
  %s4 = inlined_call_operand.vmem [shape: f32[128,256], index: 4, kind: output, shape index: {}]
  %s5 = sld [smem:[#allocation0]]
  $region200: #{efficient_interaction_bilinear.1} parent=0
    _
  %s7 = ssub.s32 1, %s5
  %s8 = scalar_select 0, %s7, %s5
  $region1: #{efficient_interaction_bilinear.1} parent=0
    #allocation2 [shape = 'u8[28672]{0}', space=vmem, size = 0x7000, scoped, tag = 'input window, operand 0']
    #allocation3 [shape = 'u8[131072]{0}', space=vmem, size = 0x20000, scoped, tag = 'input window, operand 1']
    #allocation4 [shape = 'u8[131072]{0}', space=vmem, size = 0x20000, scoped, tag = 'input window, operand 2']
    #allocation5 [shape = 'u8[131072]{0}', space=vmem, size = 0x20000, scoped, tag = 'output window, operand 0']
    loop: start=0, step=1, limit=4
    $region2: #{efficient_interaction_bilinear.1} parent=1 // loop_pre_header
      _
    $region3: #{efficient_interaction_bilinear.1} parent=1 // loop_header
      %s10 = sphi 0, %s14
      %p11 = scmp.ge.s32.totalorder %s10, 4
      %s20 = sphi 0, %s22
      %s23 = sphi 0, %s20
      %s24 = sphi 0, %s23
      %s40 = sphi 0, %s24
      %s46 = sphi 0, %s48
      %s49 = sphi 0, %s46
      %s50 = sphi 0, %s49
      %s66 = sphi 0, %s50
      %s72 = sphi 0, %s74
      %s75 = sphi 0, %s72
      %s76 = sphi 0, %s75
      %s92 = sphi 0, %s76
      %s96 = sphi 0, %s96
      %s98 = sphi 0, %s96
      %s99 = sphi 0, %s98
      %s113 = sphi 0, %s99
      %s119 = sphi 0, %s121
      %s122 = sphi 0, %s119
      %s123 = sphi 0, %s122
      %s139 = sphi 0, %s123
    $region4: #{efficient_interaction_bilinear.1} parent=1 // loop_header_branch
      %13 = sbr.rel (%p11) target = $region8
    $region5: #{efficient_interaction_bilinear.1} parent=1 // loop_body
      %s15 = ssub.s32 %s10, 1
      %s16 = ssub.s32 %s10, 2
      %s17 = sadd.s32 %s10, 1
      %s18 = ssub.s32 %s10, %s17
      %p19 = scmp.eq.s32.totalorder %s18, 0
      %s21 = sadd.s32 %s20, 1
      %s22 = scalar_select %p19, %s20, %s21
      %p25 = pneg %p19
      %p26 = scmp.eq.s32.totalorder %s10, 1
      %p27 = por %p25, %p26
      %p28 = scmp.ne.s32.totalorder %s20, %s23
      %p29 = scmp.eq.s32.totalorder %s10, 0
      %p30 = por %p28, %p29
      %p31 = scmp.ne.s32.totalorder %s20, %s23
      %p32 = scmp.eq.s32.totalorder %s15, 1
      %p33 = por %p31, %p32
      %p34 = scmp.ne.s32.totalorder %s23, %s24
      %p35 = scmp.eq.s32.totalorder %s15, 0
      %p36 = por %p34, %p35
      %p37 = scmp.ne.s32.totalorder %s23, %s24
      %p38 = scmp.eq.s32.totalorder %s16, 1
      %p39 = por %p37, %p38
      %p41 = scmp.ne.s32.totalorder %s24, %s40
      %p42 = scmp.eq.s32.totalorder %s16, 0
      %p43 = por %p41, %p42
      %s44 = ssub.s32 %s10, %s17
      %p45 = scmp.eq.s32.totalorder %s44, 0
      %s47 = sadd.s32 %s46, 1
      %s48 = scalar_select %p45, %s46, %s47
      %p51 = pneg %p45
      %p52 = scmp.eq.s32.totalorder %s10, 1
      %p53 = por %p51, %p52
      %p54 = scmp.ne.s32.totalorder %s46, %s49
      %p55 = scmp.eq.s32.totalorder %s10, 0
      %p56 = por %p54, %p55
      %p57 = scmp.ne.s32.totalorder %s46, %s49
      %p58 = scmp.eq.s32.totalorder %s15, 1
      %p59 = por %p57, %p58
      %p60 = scmp.ne.s32.totalorder %s49, %s50
      %p61 = scmp.eq.s32.totalorder %s15, 0
      %p62 = por %p60, %p61
      %p63 = scmp.ne.s32.totalorder %s49, %s50
      %p64 = scmp.eq.s32.totalorder %s16, 1
      %p65 = por %p63, %p64
      %p67 = scmp.ne.s32.totalorder %s50, %s66
      %p68 = scmp.eq.s32.totalorder %s16, 0
      %p69 = por %p67, %p68
      %s70 = ssub.s32 %s10, %s17
      %p71 = scmp.eq.s32.totalorder %s70, 0
      %s73 = sadd.s32 %s72, 1
      %s74 = scalar_select %p71, %s72, %s73
      %p77 = pneg %p71
      %p78 = scmp.eq.s32.totalorder %s10, 1
      %p79 = por %p77, %p78
      %p80 = scmp.ne.s32.totalorder %s72, %s75
      %p81 = scmp.eq.s32.totalorder %s10, 0
      %p82 = por %p80, %p81
      %p83 = scmp.ne.s32.totalorder %s72, %s75
      %p84 = scmp.eq.s32.totalorder %s15, 1
      %p85 = por %p83, %p84
      %p86 = scmp.ne.s32.totalorder %s75, %s76
      %p87 = scmp.eq.s32.totalorder %s15, 0
      %p88 = por %p86, %p87
      %p89 = scmp.ne.s32.totalorder %s75, %s76
      %p90 = scmp.eq.s32.totalorder %s16, 1
      %p91 = por %p89, %p90
      %p93 = scmp.ne.s32.totalorder %s76, %s92
      %p94 = scmp.eq.s32.totalorder %s16, 0
      %p95 = por %p93, %p94
      %s97 = sadd.s32 %s96, 1
      %p100 = scmp.eq.s32.totalorder %s10, 1
      %p101 = scmp.ne.s32.totalorder %s96, %s98
      %p102 = scmp.eq.s32.totalorder %s10, 0
      %p103 = por %p101, %p102
      %p104 = scmp.ne.s32.totalorder %s96, %s98
      %p105 = scmp.eq.s32.totalorder %s15, 1
      %p106 = por %p104, %p105
      %p107 = scmp.ne.s32.totalorder %s98, %s99
      %p108 = scmp.eq.s32.totalorder %s15, 0
      %p109 = por %p107, %p108
      %p110 = scmp.ne.s32.totalorder %s98, %s99
      %p111 = scmp.eq.s32.totalorder %s16, 1
      %p112 = por %p110, %p111
      %p114 = scmp.ne.s32.totalorder %s99, %s113
      %p115 = scmp.eq.s32.totalorder %s16, 0
      %p116 = por %p114, %p115
      %s117 = ssub.s32 %s10, %s17
      %p118 = scmp.eq.s32.totalorder %s117, 0
      %s120 = sadd.s32 %s119, 1
      %s121 = scalar_select %p118, %s119, %s120
      %p124 = pneg %p118
      %p125 = scmp.eq.s32.totalorder %s10, 1
      %p126 = por %p124, %p125
      %p127 = scmp.ne.s32.totalorder %s119, %s122
      %p128 = scmp.eq.s32.totalorder %s10, 0
      %p129 = por %p127, %p128
      %p130 = scmp.ne.s32.totalorder %s119, %s122
      %p131 = scmp.eq.s32.totalorder %s15, 1
      %p132 = por %p130, %p131
      %p133 = scmp.ne.s32.totalorder %s122, %s123
      %p134 = scmp.eq.s32.totalorder %s15, 0
      %p135 = por %p133, %p134
      %p136 = scmp.ne.s32.totalorder %s122, %s123
      %p137 = scmp.eq.s32.totalorder %s16, 1
      %p138 = por %p136, %p137
      %p140 = scmp.ne.s32.totalorder %s123, %s139
      %p141 = scmp.eq.s32.totalorder %s16, 0
      %p142 = por %p140, %p141
      %p143 = scmp.le.s32.totalorder 1, %s10
      %p144 = scmp.lt.s32.totalorder %s10, 3
      %p145 = pnand %p143, %p144
      %p146 = pneg %p145
      // Predicated region
      $region9: #{efficient_interaction_bilinear.1} parent=5 // pred_check
        _
      $region10: #{efficient_interaction_bilinear.1} parent=5 // pred_check_branch
        %148 = sbr.rel (%p145) target = $region12
      $region11: #{efficient_interaction_bilinear.1} parent=5 // pred_region
        %s149 = ssub.s32 %s10, 1
        // Predicated region
        $region13: #{efficient_interaction_bilinear.1} parent=11 // pred_check
          %p150 = pneg %p109
        $region14: #{efficient_interaction_bilinear.1} parent=11 // pred_check_branch
          %152 = sbr.rel (%p150) target = $region16
        $region15: #{efficient_interaction_bilinear.1} parent=11 // pred_region
          _
        $region16: #{efficient_interaction_bilinear.1} parent=11 // pred_fallthru
          _
      $region12: #{efficient_interaction_bilinear.1} parent=5 // pred_fallthru
        _
      %p153 = scmp.lt.s32.totalorder %s10, 2
      // Predicated region
      $region17: #{efficient_interaction_bilinear.1} parent=5 // pred_check
        %p154 = pneg %p153
      $region18: #{efficient_interaction_bilinear.1} parent=5 // pred_check_branch
        %156 = sbr.rel (%p154) target = $region20
      $region19: #{efficient_interaction_bilinear.1} parent=5 // pred_region
        // Predicated region
        $region21: #{efficient_interaction_bilinear.1} parent=19 // pred_check
          %p157 = pneg %p30
        $region22: #{efficient_interaction_bilinear.1} parent=19 // pred_check_branch
          %159 = sbr.rel (%p157) target = $region24
        $region23: #{efficient_interaction_bilinear.1} parent=19 // pred_region
          %s160 = sand.u32 %s20, 1
          %s161 = sand.u32 %s20, 1
          %s162 = smul.addr %s161, 28
          %s163 = scalar_lea.vmem [#allocation2], %s162
          %s164 = smul.addr %s10, 4
          %s165 = scalar_lea.vmem %s0, %s164
          // Predicated region
          $region25: #{efficient_interaction_bilinear.1} parent=23 // pred_check
            _
          $region26: #{efficient_interaction_bilinear.1} parent=23 // pred_check_branch
            %167 = sbr.rel (0) target = $region28
          $region27: #{efficient_interaction_bilinear.1} parent=23 // pred_region
            // Predicated region
            $region29: #{efficient_interaction_bilinear.1} parent=27 // pred_check
              _
            $region30: #{efficient_interaction_bilinear.1} parent=27 // pred_check_branch
              %169 = sbr.rel target = $region32
            $region31: #{efficient_interaction_bilinear.1} parent=27 // pred_region
              // Predicated region
              $region44: #{efficient_interaction_bilinear.1} parent=31 // pred_check
                _
              $region45: #{efficient_interaction_bilinear.1} parent=31 // pred_check_branch
                %197 = sbr.rel (0) target = $region47
              $region46: #{efficient_interaction_bilinear.1} parent=31 // pred_region
                loop: start=0, step=1, limit=1
                $region48: #{efficient_interaction_bilinear.1} parent=46 // loop_pre_header
                  _
                $region49: #{efficient_interaction_bilinear.1} parent=46 // loop_header
                  %s199 = sphi 0, %s203
                  %p200 = scmp.ge.s32.totalorder %s199, 1
                  %s204 = sphi %s165, %s165
                  %s205 = sphi %s163, %s163
                $region50: #{efficient_interaction_bilinear.1} parent=46 // loop_header_branch
                  %202 = sbr.rel (%p200) target = $region54
                $region51: #{efficient_interaction_bilinear.1} parent=46 // loop_body
                  _
                $region52: #{efficient_interaction_bilinear.1} parent=46 // loop_footer
                  %s203 = sadd.s32 1, %s199
                $region53: #{efficient_interaction_bilinear.1} parent=46 // loop_footer_branch
                  %198 = sbr.rel target = $region49
                $region54: #{efficient_interaction_bilinear.1} parent=46 // loop_exit
                  _
                %s207 = ssub.s32 16, 1
                loop: start=0, step=1, limit=1
                $region55: #{efficient_interaction_bilinear.1} parent=46 // loop_pre_header
                  _
                $region56: #{efficient_interaction_bilinear.1} parent=46 // loop_header
                  %s209 = sphi 0, %s213
                  %p210 = scmp.ge.s32.totalorder %s209, 1
                  %s214 = sphi %s165, %s165
                  %s215 = sphi %s163, %s163
                $region57: #{efficient_interaction_bilinear.1} parent=46 // loop_header_branch
                  %212 = sbr.rel (%p210) target = $region61
                $region58: #{efficient_interaction_bilinear.1} parent=46 // loop_body
                  %v216 = vld [vmem:[%s214] sm:%s207]
                  %217 = vst [vmem:[%s215] sm:%s207] %v216
                  %v218 = vld [vmem:[%s214 + $0x8] sm:%s207]
                  %219 = vst [vmem:[%s215 + $0x4] sm:%s207] %v218
                  %v220 = vld [vmem:[%s214 + $0x10] sm:%s207]
                  %221 = vst [vmem:[%s215 + $0x8] sm:%s207] %v220
                  %v222 = vld [vmem:[%s214 + $0x18] sm:%s207]
                  %223 = vst [vmem:[%s215 + $0xc] sm:%s207] %v222
                  %v224 = vld [vmem:[%s214 + $0x20] sm:%s207]
                  %225 = vst [vmem:[%s215 + $0x10] sm:%s207] %v224
                  %v226 = vld [vmem:[%s214 + $0x28] sm:%s207]
                  %227 = vst [vmem:[%s215 + $0x14] sm:%s207] %v226
                  %v228 = vld [vmem:[%s214 + $0x30] sm:%s207]
                  %229 = vst [vmem:[%s215 + $0x18] sm:%s207] %v228
                $region59: #{efficient_interaction_bilinear.1} parent=46 // loop_footer
                  %s213 = sadd.s32 1, %s209
                $region60: #{efficient_interaction_bilinear.1} parent=46 // loop_footer_branch
                  %208 = sbr.rel target = $region56
                $region61: #{efficient_interaction_bilinear.1} parent=46 // loop_exit
                  _
              $region47: #{efficient_interaction_bilinear.1} parent=31 // pred_fallthru
                _
            $region32: #{efficient_interaction_bilinear.1} parent=27 // pred_fallthru
              _
            // Predicated region
            $region33: #{efficient_interaction_bilinear.1} parent=27 // pred_check
              _
            $region34: #{efficient_interaction_bilinear.1} parent=27 // pred_check_branch
              %171 = sbr.rel (0) target = $region36
            $region35: #{efficient_interaction_bilinear.1} parent=27 // pred_region
              %s173 = ssub.s32 16, 1
              loop: start=0, step=1, limit=1
              $region37: #{efficient_interaction_bilinear.1} parent=35 // loop_pre_header
                _
              $region38: #{efficient_interaction_bilinear.1} parent=35 // loop_header
                %s175 = sphi 0, %s179
                %p176 = scmp.ge.s32.totalorder %s175, 1
                %s180 = sphi %s165, %s165
                %s181 = sphi %s163, %s163
              $region39: #{efficient_interaction_bilinear.1} parent=35 // loop_header_branch
                %178 = sbr.rel (%p176) target = $region43
              $region40: #{efficient_interaction_bilinear.1} parent=35 // loop_body
                %v182 = vld [vmem:[%s180] sm:%s173]
                %183 = vst [vmem:[%s181] sm:%s173] %v182
                %v184 = vld [vmem:[%s180 + $0x8] sm:%s173]
                %185 = vst [vmem:[%s181 + $0x4] sm:%s173] %v184
                %v186 = vld [vmem:[%s180 + $0x10] sm:%s173]
                %187 = vst [vmem:[%s181 + $0x8] sm:%s173] %v186
                %v188 = vld [vmem:[%s180 + $0x18] sm:%s173]
                %189 = vst [vmem:[%s181 + $0xc] sm:%s173] %v188
                %v190 = vld [vmem:[%s180 + $0x20] sm:%s173]
                %191 = vst [vmem:[%s181 + $0x10] sm:%s173] %v190
                %v192 = vld [vmem:[%s180 + $0x28] sm:%s173]
                %193 = vst [vmem:[%s181 + $0x14] sm:%s173] %v192
                %v194 = vld [vmem:[%s180 + $0x30] sm:%s173]
                %195 = vst [vmem:[%s181 + $0x18] sm:%s173] %v194
              $region41: #{efficient_interaction_bilinear.1} parent=35 // loop_footer
                %s179 = sadd.s32 1, %s175
              $region42: #{efficient_interaction_bilinear.1} parent=35 // loop_footer_branch
                %174 = sbr.rel target = $region38
              $region43: #{efficient_interaction_bilinear.1} parent=35 // loop_exit
                _
            $region36: #{efficient_interaction_bilinear.1} parent=27 // pred_fallthru
              _
          $region28: #{efficient_interaction_bilinear.1} parent=23 // pred_fallthru
            _
          %230 = vnop
        $region24: #{efficient_interaction_bilinear.1} parent=19 // pred_fallthru
          _
        // Predicated region
        $region62: #{efficient_interaction_bilinear.1} parent=19 // pred_check
          %p231 = pneg %p56
        $region63: #{efficient_interaction_bilinear.1} parent=19 // pred_check_branch
          %233 = sbr.rel (%p231) target = $region65
        $region64: #{efficient_interaction_bilinear.1} parent=19 // pred_region
          %s234 = sand.u32 %s46, 1
          %s235 = sand.u32 %s46, 1
          %s236 = smul.addr %s235, 128
          %s237 = scalar_lea.vmem [#allocation3], %s236
          %s238 = smul.addr %s10, 8
          %s239 = scalar_lea.vmem %s1, %s238
          // Predicated region
          $region66: #{efficient_interaction_bilinear.1} parent=64 // pred_check
            _
          $region67: #{efficient_interaction_bilinear.1} parent=64 // pred_check_branch
            %241 = sbr.rel (0) target = $region69
          $region68: #{efficient_interaction_bilinear.1} parent=64 // pred_region
            // Predicated region
            $region70: #{efficient_interaction_bilinear.1} parent=68 // pred_check
              _
            $region71: #{efficient_interaction_bilinear.1} parent=68 // pred_check_branch
              %243 = sbr.rel (0) target = $region73
            $region72: #{efficient_interaction_bilinear.1} parent=68 // pred_region
              // Predicated region
              $region85: #{efficient_interaction_bilinear.1} parent=72 // pred_check
                _
              $region86: #{efficient_interaction_bilinear.1} parent=72 // pred_check_branch
                %289 = sbr.rel (0) target = $region88
              $region87: #{efficient_interaction_bilinear.1} parent=72 // pred_region
                loop: start=0, step=1, limit=1
                $region89: #{efficient_interaction_bilinear.1} parent=87 // loop_pre_header
                  _
                $region90: #{efficient_interaction_bilinear.1} parent=87 // loop_header
                  %s291 = sphi 0, %s295
                  %p292 = scmp.ge.s32.totalorder %s291, 1
                  %s296 = sphi %s239, %s239
                  %s297 = sphi %s237, %s237
                $region91: #{efficient_interaction_bilinear.1} parent=87 // loop_header_branch
                  %294 = sbr.rel (%p292) target = $region95
                $region92: #{efficient_interaction_bilinear.1} parent=87 // loop_body
                  %v298 = vld [vmem:[%s296] sm:$0xff]
                  %299 = vst [vmem:[%s297] sm:$0xff] %v298
                  %v300 = vld [vmem:[%s296 + $0x10] sm:$0xff]
                  %301 = vst [vmem:[%s297 + $0x8] sm:$0xff] %v300
                  %v302 = vld [vmem:[%s296 + $0x20] sm:$0xff]
                  %303 = vst [vmem:[%s297 + $0x10] sm:$0xff] %v302
                  %v304 = vld [vmem:[%s296 + $0x30] sm:$0xff]
                  %305 = vst [vmem:[%s297 + $0x18] sm:$0xff] %v304
                  %v306 = vld [vmem:[%s296 + $0x40] sm:$0xff]
                  %307 = vst [vmem:[%s297 + $0x20] sm:$0xff] %v306
                  %v308 = vld [vmem:[%s296 + $0x50] sm:$0xff]
                  %309 = vst [vmem:[%s297 + $0x28] sm:$0xff] %v308
                  %v310 = vld [vmem:[%s296 + $0x60] sm:$0xff]
                  %311 = vst [vmem:[%s297 + $0x30] sm:$0xff] %v310
                  %v312 = vld [vmem:[%s296 + $0x70] sm:$0xff]
                  %313 = vst [vmem:[%s297 + $0x38] sm:$0xff] %v312
                  %v314 = vld [vmem:[%s296 + $0x80] sm:$0xff]
                  %315 = vst [vmem:[%s297 + $0x40] sm:$0xff] %v314
                  %v316 = vld [vmem:[%s296 + $0x90] sm:$0xff]
                  %317 = vst [vmem:[%s297 + $0x48] sm:$0xff] %v316
                  %v318 = vld [vmem:[%s296 + $0xa0] sm:$0xff]
                  %319 = vst [vmem:[%s297 + $0x50] sm:$0xff] %v318
                  %v320 = vld [vmem:[%s296 + $0xb0] sm:$0xff]
                  %321 = vst [vmem:[%s297 + $0x58] sm:$0xff] %v320
                  %v322 = vld [vmem:[%s296 + $0xc0] sm:$0xff]
                  %323 = vst [vmem:[%s297 + $0x60] sm:$0xff] %v322
                  %v324 = vld [vmem:[%s296 + $0xd0] sm:$0xff]
                  %325 = vst [vmem:[%s297 + $0x68] sm:$0xff] %v324
                  %v326 = vld [vmem:[%s296 + $0xe0] sm:$0xff]
                  %327 = vst [vmem:[%s297 + $0x70] sm:$0xff] %v326
                  %v328 = vld [vmem:[%s296 + $0xf0] sm:$0xff]
                  %329 = vst [vmem:[%s297 + $0x78] sm:$0xff] %v328
                $region93: #{efficient_interaction_bilinear.1} parent=87 // loop_footer
                  %s295 = sadd.s32 1, %s291
                $region94: #{efficient_interaction_bilinear.1} parent=87 // loop_footer_branch
                  %290 = sbr.rel target = $region90
                $region95: #{efficient_interaction_bilinear.1} parent=87 // loop_exit
                  _
              $region88: #{efficient_interaction_bilinear.1} parent=72 // pred_fallthru
                _
              // Predicated region
              $region96: #{efficient_interaction_bilinear.1} parent=72 // pred_check
                _
              $region97: #{efficient_interaction_bilinear.1} parent=72 // pred_check_branch
                %331 = sbr.rel target = $region99
              $region98: #{efficient_interaction_bilinear.1} parent=72 // pred_region
                _
              $region99: #{efficient_interaction_bilinear.1} parent=72 // pred_fallthru
                _
            $region73: #{efficient_interaction_bilinear.1} parent=68 // pred_fallthru
              _
            // Predicated region
            $region74: #{efficient_interaction_bilinear.1} parent=68 // pred_check
              _
            $region75: #{efficient_interaction_bilinear.1} parent=68 // pred_check_branch
              %245 = sbr.rel target = $region77
            $region76: #{efficient_interaction_bilinear.1} parent=68 // pred_region
              %s247 = ssub.s32 256, 1
              loop: start=0, step=1, limit=1
              $region78: #{efficient_interaction_bilinear.1} parent=76 // loop_pre_header
                _
              $region79: #{efficient_interaction_bilinear.1} parent=76 // loop_header
                %s249 = sphi 0, %s253
                %p250 = scmp.ge.s32.totalorder %s249, 1
                %s254 = sphi %s239, %s239
                %s255 = sphi %s237, %s237
              $region80: #{efficient_interaction_bilinear.1} parent=76 // loop_header_branch
                %252 = sbr.rel (%p250) target = $region84
              $region81: #{efficient_interaction_bilinear.1} parent=76 // loop_body
                %v256 = vld [vmem:[%s254] sm:%s247]
                %257 = vst [vmem:[%s255] sm:%s247] %v256
                %v258 = vld [vmem:[%s254 + $0x10] sm:%s247]
                %259 = vst [vmem:[%s255 + $0x8] sm:%s247] %v258
                %v260 = vld [vmem:[%s254 + $0x20] sm:%s247]
                %261 = vst [vmem:[%s255 + $0x10] sm:%s247] %v260
                %v262 = vld [vmem:[%s254 + $0x30] sm:%s247]
                %263 = vst [vmem:[%s255 + $0x18] sm:%s247] %v262
                %v264 = vld [vmem:[%s254 + $0x40] sm:%s247]
                %265 = vst [vmem:[%s255 + $0x20] sm:%s247] %v264
                %v266 = vld [vmem:[%s254 + $0x50] sm:%s247]
                %267 = vst [vmem:[%s255 + $0x28] sm:%s247] %v266
                %v268 = vld [vmem:[%s254 + $0x60] sm:%s247]
                %269 = vst [vmem:[%s255 + $0x30] sm:%s247] %v268
                %v270 = vld [vmem:[%s254 + $0x70] sm:%s247]
                %271 = vst [vmem:[%s255 + $0x38] sm:%s247] %v270
                %v272 = vld [vmem:[%s254 + $0x80] sm:%s247]
                %273 = vst [vmem:[%s255 + $0x40] sm:%s247] %v272
                %v274 = vld [vmem:[%s254 + $0x90] sm:%s247]
                %275 = vst [vmem:[%s255 + $0x48] sm:%s247] %v274
                %v276 = vld [vmem:[%s254 + $0xa0] sm:%s247]
                %277 = vst [vmem:[%s255 + $0x50] sm:%s247] %v276
                %v278 = vld [vmem:[%s254 + $0xb0] sm:%s247]
                %279 = vst [vmem:[%s255 + $0x58] sm:%s247] %v278
                %v280 = vld [vmem:[%s254 + $0xc0] sm:%s247]
                %281 = vst [vmem:[%s255 + $0x60] sm:%s247] %v280
                %v282 = vld [vmem:[%s254 + $0xd0] sm:%s247]
                %283 = vst [vmem:[%s255 + $0x68] sm:%s247] %v282
                %v284 = vld [vmem:[%s254 + $0xe0] sm:%s247]
                %285 = vst [vmem:[%s255 + $0x70] sm:%s247] %v284
                %v286 = vld [vmem:[%s254 + $0xf0] sm:%s247]
                %287 = vst [vmem:[%s255 + $0x78] sm:%s247] %v286
              $region82: #{efficient_interaction_bilinear.1} parent=76 // loop_footer
                %s253 = sadd.s32 1, %s249
              $region83: #{efficient_interaction_bilinear.1} parent=76 // loop_footer_branch
                %248 = sbr.rel target = $region79
              $region84: #{efficient_interaction_bilinear.1} parent=76 // loop_exit
                _
            $region77: #{efficient_interaction_bilinear.1} parent=68 // pred_fallthru
              _
          $region69: #{efficient_interaction_bilinear.1} parent=64 // pred_fallthru
            _
          %332 = vnop
        $region65: #{efficient_interaction_bilinear.1} parent=19 // pred_fallthru
          _
        // Predicated region
        $region100: #{efficient_interaction_bilinear.1} parent=19 // pred_check
          %p333 = pneg %p82
        $region101: #{efficient_interaction_bilinear.1} parent=19 // pred_check_branch
          %335 = sbr.rel (%p333) target = $region103
        $region102: #{efficient_interaction_bilinear.1} parent=19 // pred_region
          %s336 = sand.u32 %s72, 1
          %s337 = sand.u32 %s72, 1
          %s338 = smul.addr %s337, 128
          %s339 = scalar_lea.vmem [#allocation4], %s338
          %s340 = smul.addr %s10, 8
          %s341 = scalar_lea.vmem %s2, %s340
          // Predicated region
          $region104: #{efficient_interaction_bilinear.1} parent=102 // pred_check
            _
          $region105: #{efficient_interaction_bilinear.1} parent=102 // pred_check_branch
            %343 = sbr.rel (0) target = $region107
          $region106: #{efficient_interaction_bilinear.1} parent=102 // pred_region
            // Predicated region
            $region108: #{efficient_interaction_bilinear.1} parent=106 // pred_check
              _
            $region109: #{efficient_interaction_bilinear.1} parent=106 // pred_check_branch
              %345 = sbr.rel (0) target = $region111
            $region110: #{efficient_interaction_bilinear.1} parent=106 // pred_region
              // Predicated region
              $region123: #{efficient_interaction_bilinear.1} parent=110 // pred_check
                _
              $region124: #{efficient_interaction_bilinear.1} parent=110 // pred_check_branch
                %391 = sbr.rel (0) target = $region126
              $region125: #{efficient_interaction_bilinear.1} parent=110 // pred_region
                loop: start=0, step=1, limit=1
                $region127: #{efficient_interaction_bilinear.1} parent=125 // loop_pre_header
                  _
                $region128: #{efficient_interaction_bilinear.1} parent=125 // loop_header
                  %s393 = sphi 0, %s397
                  %p394 = scmp.ge.s32.totalorder %s393, 1
                  %s398 = sphi %s341, %s341
                  %s399 = sphi %s339, %s339
                $region129: #{efficient_interaction_bilinear.1} parent=125 // loop_header_branch
                  %396 = sbr.rel (%p394) target = $region133
                $region130: #{efficient_interaction_bilinear.1} parent=125 // loop_body
                  %v400 = vld [vmem:[%s398] sm:$0xff]
                  %401 = vst [vmem:[%s399] sm:$0xff] %v400
                  %v402 = vld [vmem:[%s398 + $0x10] sm:$0xff]
                  %403 = vst [vmem:[%s399 + $0x8] sm:$0xff] %v402
                  %v404 = vld [vmem:[%s398 + $0x20] sm:$0xff]
                  %405 = vst [vmem:[%s399 + $0x10] sm:$0xff] %v404
                  %v406 = vld [vmem:[%s398 + $0x30] sm:$0xff]
                  %407 = vst [vmem:[%s399 + $0x18] sm:$0xff] %v406
                  %v408 = vld [vmem:[%s398 + $0x40] sm:$0xff]
                  %409 = vst [vmem:[%s399 + $0x20] sm:$0xff] %v408
                  %v410 = vld [vmem:[%s398 + $0x50] sm:$0xff]
                  %411 = vst [vmem:[%s399 + $0x28] sm:$0xff] %v410
                  %v412 = vld [vmem:[%s398 + $0x60] sm:$0xff]
                  %413 = vst [vmem:[%s399 + $0x30] sm:$0xff] %v412
                  %v414 = vld [vmem:[%s398 + $0x70] sm:$0xff]
                  %415 = vst [vmem:[%s399 + $0x38] sm:$0xff] %v414
                  %v416 = vld [vmem:[%s398 + $0x80] sm:$0xff]
                  %417 = vst [vmem:[%s399 + $0x40] sm:$0xff] %v416
                  %v418 = vld [vmem:[%s398 + $0x90] sm:$0xff]
                  %419 = vst [vmem:[%s399 + $0x48] sm:$0xff] %v418
                  %v420 = vld [vmem:[%s398 + $0xa0] sm:$0xff]
                  %421 = vst [vmem:[%s399 + $0x50] sm:$0xff] %v420
                  %v422 = vld [vmem:[%s398 + $0xb0] sm:$0xff]
                  %423 = vst [vmem:[%s399 + $0x58] sm:$0xff] %v422
                  %v424 = vld [vmem:[%s398 + $0xc0] sm:$0xff]
                  %425 = vst [vmem:[%s399 + $0x60] sm:$0xff] %v424
                  %v426 = vld [vmem:[%s398 + $0xd0] sm:$0xff]
                  %427 = vst [vmem:[%s399 + $0x68] sm:$0xff] %v426
                  %v428 = vld [vmem:[%s398 + $0xe0] sm:$0xff]
                  %429 = vst [vmem:[%s399 + $0x70] sm:$0xff] %v428
                  %v430 = vld [vmem:[%s398 + $0xf0] sm:$0xff]
                  %431 = vst [vmem:[%s399 + $0x78] sm:$0xff] %v430
                $region131: #{efficient_interaction_bilinear.1} parent=125 // loop_footer
                  %s397 = sadd.s32 1, %s393
                $region132: #{efficient_interaction_bilinear.1} parent=125 // loop_footer_branch
                  %392 = sbr.rel target = $region128
                $region133: #{efficient_interaction_bilinear.1} parent=125 // loop_exit
                  _
              $region126: #{efficient_interaction_bilinear.1} parent=110 // pred_fallthru
                _
              // Predicated region
              $region134: #{efficient_interaction_bilinear.1} parent=110 // pred_check
                _
              $region135: #{efficient_interaction_bilinear.1} parent=110 // pred_check_branch
                %433 = sbr.rel target = $region137
              $region136: #{efficient_interaction_bilinear.1} parent=110 // pred_region
                _
              $region137: #{efficient_interaction_bilinear.1} parent=110 // pred_fallthru
                _
            $region111: #{efficient_interaction_bilinear.1} parent=106 // pred_fallthru
              _
            // Predicated region
            $region112: #{efficient_interaction_bilinear.1} parent=106 // pred_check
              _
            $region113: #{efficient_interaction_bilinear.1} parent=106 // pred_check_branch
              %347 = sbr.rel target = $region115
            $region114: #{efficient_interaction_bilinear.1} parent=106 // pred_region
              %s349 = ssub.s32 256, 1
              loop: start=0, step=1, limit=1
              $region116: #{efficient_interaction_bilinear.1} parent=114 // loop_pre_header
                _
              $region117: #{efficient_interaction_bilinear.1} parent=114 // loop_header
                %s351 = sphi 0, %s355
                %p352 = scmp.ge.s32.totalorder %s351, 1
                %s356 = sphi %s341, %s341
                %s357 = sphi %s339, %s339
              $region118: #{efficient_interaction_bilinear.1} parent=114 // loop_header_branch
                %354 = sbr.rel (%p352) target = $region122
              $region119: #{efficient_interaction_bilinear.1} parent=114 // loop_body
                %v358 = vld [vmem:[%s356] sm:%s349]
                %359 = vst [vmem:[%s357] sm:%s349] %v358
                %v360 = vld [vmem:[%s356 + $0x10] sm:%s349]
                %361 = vst [vmem:[%s357 + $0x8] sm:%s349] %v360
                %v362 = vld [vmem:[%s356 + $0x20] sm:%s349]
                %363 = vst [vmem:[%s357 + $0x10] sm:%s349] %v362
                %v364 = vld [vmem:[%s356 + $0x30] sm:%s349]
                %365 = vst [vmem:[%s357 + $0x18] sm:%s349] %v364
                %v366 = vld [vmem:[%s356 + $0x40] sm:%s349]
                %367 = vst [vmem:[%s357 + $0x20] sm:%s349] %v366
                %v368 = vld [vmem:[%s356 + $0x50] sm:%s349]
                %369 = vst [vmem:[%s357 + $0x28] sm:%s349] %v368
                %v370 = vld [vmem:[%s356 + $0x60] sm:%s349]
                %371 = vst [vmem:[%s357 + $0x30] sm:%s349] %v370
                %v372 = vld [vmem:[%s356 + $0x70] sm:%s349]
                %373 = vst [vmem:[%s357 + $0x38] sm:%s349] %v372
                %v374 = vld [vmem:[%s356 + $0x80] sm:%s349]
                %375 = vst [vmem:[%s357 + $0x40] sm:%s349] %v374
                %v376 = vld [vmem:[%s356 + $0x90] sm:%s349]
                %377 = vst [vmem:[%s357 + $0x48] sm:%s349] %v376
                %v378 = vld [vmem:[%s356 + $0xa0] sm:%s349]
                %379 = vst [vmem:[%s357 + $0x50] sm:%s349] %v378
                %v380 = vld [vmem:[%s356 + $0xb0] sm:%s349]
                %381 = vst [vmem:[%s357 + $0x58] sm:%s349] %v380
                %v382 = vld [vmem:[%s356 + $0xc0] sm:%s349]
                %383 = vst [vmem:[%s357 + $0x60] sm:%s349] %v382
                %v384 = vld [vmem:[%s356 + $0xd0] sm:%s349]
                %385 = vst [vmem:[%s357 + $0x68] sm:%s349] %v384
                %v386 = vld [vmem:[%s356 + $0xe0] sm:%s349]
                %387 = vst [vmem:[%s357 + $0x70] sm:%s349] %v386
                %v388 = vld [vmem:[%s356 + $0xf0] sm:%s349]
                %389 = vst [vmem:[%s357 + $0x78] sm:%s349] %v388
              $region120: #{efficient_interaction_bilinear.1} parent=114 // loop_footer
                %s355 = sadd.s32 1, %s351
              $region121: #{efficient_interaction_bilinear.1} parent=114 // loop_footer_branch
                %350 = sbr.rel target = $region117
              $region122: #{efficient_interaction_bilinear.1} parent=114 // loop_exit
                _
            $region115: #{efficient_interaction_bilinear.1} parent=106 // pred_fallthru
              _
          $region107: #{efficient_interaction_bilinear.1} parent=102 // pred_fallthru
            _
          %434 = vnop
        $region103: #{efficient_interaction_bilinear.1} parent=19 // pred_fallthru
          _
      $region20: #{efficient_interaction_bilinear.1} parent=5 // pred_fallthru
        _
      %p435 = scmp.le.s32.totalorder 1, %s10
      %p436 = scmp.lt.s32.totalorder %s10, 3
      %p437 = pnand %p435, %p436
      %p438 = pneg %p437
      // Predicated region
      $region138: #{efficient_interaction_bilinear.1} parent=5 // pred_check
        _
      $region139: #{efficient_interaction_bilinear.1} parent=5 // pred_check_branch
        %440 = sbr.rel (%p437) target = $region141
      $region140: #{efficient_interaction_bilinear.1} parent=5 // pred_region
        %s441 = ssub.s32 %s10, 1
        %s442 = sand.u32 %s23, 1
        %s443 = sand.u32 %s23, 1
        %s444 = smul.addr %s443, 28
        %s445 = scalar_lea.vmem [#allocation2], %s444
        // Predicated region
        $region142: #{efficient_interaction_bilinear.1} parent=140 // pred_check
          %p446 = pneg %p36
        $region143: #{efficient_interaction_bilinear.1} parent=140 // pred_check_branch
          %448 = sbr.rel (%p446) target = $region145
        $region144: #{efficient_interaction_bilinear.1} parent=140 // pred_region
          _
        $region145: #{efficient_interaction_bilinear.1} parent=140 // pred_fallthru
          _
        %s449 = sand.u32 %s49, 1
        %s450 = sand.u32 %s49, 1
        %s451 = smul.addr %s450, 128
        %s452 = scalar_lea.vmem [#allocation3], %s451
        // Predicated region
        $region146: #{efficient_interaction_bilinear.1} parent=140 // pred_check
          %p453 = pneg %p62
        $region147: #{efficient_interaction_bilinear.1} parent=140 // pred_check_branch
          %455 = sbr.rel (%p453) target = $region149
        $region148: #{efficient_interaction_bilinear.1} parent=140 // pred_region
          _
        $region149: #{efficient_interaction_bilinear.1} parent=140 // pred_fallthru
          _
        %s456 = sand.u32 %s75, 1
        %s457 = sand.u32 %s75, 1
        %s458 = smul.addr %s457, 128
        %s459 = scalar_lea.vmem [#allocation4], %s458
        // Predicated region
        $region150: #{efficient_interaction_bilinear.1} parent=140 // pred_check
          %p460 = pneg %p88
        $region151: #{efficient_interaction_bilinear.1} parent=140 // pred_check_branch
          %462 = sbr.rel (%p460) target = $region153
        $region152: #{efficient_interaction_bilinear.1} parent=140 // pred_region
          _
        $region153: #{efficient_interaction_bilinear.1} parent=140 // pred_fallthru
          _
        %s463 = sand.u32 %s23, 1
        %s464 = sand.u32 %s23, 1
        %s465 = smul.addr %s464, 28
        %s466 = scalar_lea.vmem [#allocation2], %s465
        %p467 = pneg %p36
        %p468 = pneg %p33
        %s469 = sand.u32 %s49, 1
        %s470 = sand.u32 %s49, 1
        %s471 = smul.addr %s470, 128
        %s472 = scalar_lea.vmem [#allocation3], %s471
        %p473 = pneg %p62
        %p474 = pneg %p59
        %s475 = sand.u32 %s75, 1
        %s476 = sand.u32 %s75, 1
        %s477 = smul.addr %s476, 128
        %s478 = scalar_lea.vmem [#allocation4], %s477
        %p479 = pneg %p88
        %p480 = pneg %p85
        %p481 = pneg %p109
        %p482 = pneg %p106
        %p483 = pneg %p135
        %p484 = pneg %p132
        %s485 = sand.u32 %s122, 1
        %s486 = sand.u32 %s122, 1
        %s487 = smul.addr %s486, 128
        %s488 = scalar_lea.vmem [#allocation5], %s487
        %v489 = vld [vmem:[%s445] sm:$0xf]
        %v490 = vld [vmem:[%s445 + $0x4] sm:$0xf]
        %v491 = vld [vmem:[%s445 + $0x8] sm:$0xf]
        %v492 = vld [vmem:[%s445 + $0xc] sm:$0xf]
        %v493 = vld [vmem:[%s445 + $0x10] sm:$0xf]
        %v494 = vld [vmem:[%s445 + $0x14] sm:$0xf]
        %v495 = vld [vmem:[%s445 + $0x18] sm:$0xf]
        %v496 = vld [vmem:[%s452] sm:$0xff]
        %v497 = vld [vmem:[%s452 + $0x8] sm:$0xff]
        %v498 = vld [vmem:[%s452 + $0x10] sm:$0xff]
        %v499 = vld [vmem:[%s452 + $0x18] sm:$0xff]
        %v500 = vld [vmem:[%s452 + $0x20] sm:$0xff]
        %v501 = vld [vmem:[%s452 + $0x28] sm:$0xff]
        %v502 = vld [vmem:[%s452 + $0x30] sm:$0xff]
        %v503 = vld [vmem:[%s452 + $0x38] sm:$0xff]
        %v504 = vld [vmem:[%s452 + $0x40] sm:$0xff]
        %v505 = vld [vmem:[%s452 + $0x48] sm:$0xff]
        %v506 = vld [vmem:[%s452 + $0x50] sm:$0xff]
        %v507 = vld [vmem:[%s452 + $0x58] sm:$0xff]
        %v508 = vld [vmem:[%s452 + $0x60] sm:$0xff]
        %v509 = vld [vmem:[%s452 + $0x68] sm:$0xff]
        %v510 = vld [vmem:[%s452 + $0x70] sm:$0xff]
        %v511 = vld [vmem:[%s452 + $0x78] sm:$0xff]
        %v512 = vld [vmem:[%s459] sm:$0x7f]
        %v513 = vld [vmem:[%s459 + $0x8] sm:$0x7f]
        %v514 = vld [vmem:[%s459 + $0x10] sm:$0x7f]
        %v515 = vld [vmem:[%s459 + $0x18] sm:$0x7f]
        %v516 = vld [vmem:[%s459 + $0x20] sm:$0x7f]
        %v517 = vld [vmem:[%s459 + $0x28] sm:$0x7f]
        %v518 = vld [vmem:[%s459 + $0x30] sm:$0x7f]
        %v519 = vld [vmem:[%s459 + $0x38] sm:$0x7f]
        %v520 = vld [vmem:[%s459 + $0x40] sm:$0x7f]
        %v521 = vld [vmem:[%s459 + $0x48] sm:$0x7f]
        %v522 = vld [vmem:[%s459 + $0x50] sm:$0x7f]
        %v523 = vld [vmem:[%s459 + $0x58] sm:$0x7f]
        %v524 = vld [vmem:[%s459 + $0x60] sm:$0x7f]
        %v525 = vld [vmem:[%s459 + $0x68] sm:$0x7f]
        %v526 = vld [vmem:[%s459 + $0x70] sm:$0x7f]
        %v527 = vld [vmem:[%s459 + $0x78] sm:$0x7f]
        %v529 = vrot.slane %v489, 1
        %v530 = vrot.slane %v489, 2
        %v531 = vrot.slane %v489, 3
        %v532 = vperm.slane %v489, 0
        %v533 = vperm.slane %v529, 0
        %v534 = vperm.slane %v530, 0
        %v535 = vperm.slane %v531, 0
        %v556 = vrot.slane %v513, 7
        %vm557 = vcmask 1041409
        %v558 = vsel %vm557, %v556, %v512
        %v559 = vrot.slane %v514, 6
        %vm560 = vcmask 1042434
        %v561 = vsel %vm560, %v559, %v558
        %v562 = vrot.slane %v515, 5
        %vm563 = vcmask 1043459
        %v564 = vsel %vm563, %v562, %v561
        %v565 = vrot.slane %v516, 4
        %vm566 = vcmask 1044484
        %v567 = vsel %vm566, %v565, %v564
        %v568 = vrot.slane %v517, 3
        %vm569 = vcmask 1045509
        %v570 = vsel %vm569, %v568, %v567
        %v571 = vrot.slane %v518, 2
        %vm572 = vcmask 1046534
        %v573 = vsel %vm572, %v571, %v570
        %v574 = vrot.slane %v519, 1
        %vm575 = vcmask 1047559
        %v576 = vsel %vm575, %v574, %v573
        %v577 = vrot.slane %v521, 7
        %v578 = vsel %vm557, %v577, %v520
        %v579 = vrot.slane %v522, 6
        %v580 = vsel %vm560, %v579, %v578
        %v581 = vrot.slane %v523, 5
        %v582 = vsel %vm563, %v581, %v580
        %v583 = vrot.slane %v524, 4
        %v584 = vsel %vm566, %v583, %v582
        %v585 = vrot.slane %v525, 3
        %v586 = vsel %vm569, %v585, %v584
        %v587 = vrot.slane %v526, 2
        %v588 = vsel %vm572, %v587, %v586
        %v589 = vrot.slane %v527, 1
        %v590 = vsel %vm575, %v589, %v588
        %v593 = vmul.f32 %v532, %v576
        %v594 = vmul.f32 %v532, %v590
        %v595 = vmul.f32 %v533, %v576
        %v596 = vmul.f32 %v533, %v590
        %v597 = vmul.f32 %v534, %v576
        %v598 = vmul.f32 %v534, %v590
        %v599 = vmul.f32 %v535, %v576
        %v600 = vmul.f32 %v535, %v590
        %v601 = vadd.f32 %v593, 0.0
        %v602 = vadd.f32 %v594, 0.0
        %v603 = vadd.f32 %v595, 0.0
        %v604 = vadd.f32 %v596, 0.0
        %v605 = vadd.f32 %v597, 0.0
        %v606 = vadd.f32 %v598, 0.0
        %v607 = vadd.f32 %v599, 0.0
        %v608 = vadd.f32 %v600, 0.0
        %v610 = vrot.slane %v490, 1
        %v611 = vrot.slane %v490, 2
        %v612 = vrot.slane %v490, 3
        %v613 = vperm.slane %v490, 0
        %v614 = vperm.slane %v610, 0
        %v615 = vperm.slane %v611, 0
        %v616 = vperm.slane %v612, 0
        %v621 = vrot.slane %v512, 1
        %v622 = vsel %vm557, %v513, %v621
        %v623 = vrot.slane %v514, 7
        %v624 = vsel %vm560, %v623, %v622
        %v625 = vrot.slane %v515, 6
        %v626 = vsel %vm563, %v625, %v624
        %v627 = vrot.slane %v516, 5
        %v628 = vsel %vm566, %v627, %v626
        %v629 = vrot.slane %v517, 4
        %v630 = vsel %vm569, %v629, %v628
        %v631 = vrot.slane %v518, 3
        %v632 = vsel %vm572, %v631, %v630
        %v633 = vrot.slane %v519, 2
        %v634 = vsel %vm575, %v633, %v632
        %v635 = vrot.slane %v520, 1
        %v636 = vsel %vm557, %v521, %v635
        %v637 = vrot.slane %v522, 7
        %v638 = vsel %vm560, %v637, %v636
        %v639 = vrot.slane %v523, 6
        %v640 = vsel %vm563, %v639, %v638
        %v641 = vrot.slane %v524, 5
        %v642 = vsel %vm566, %v641, %v640
        %v643 = vrot.slane %v525, 4
        %v644 = vsel %vm569, %v643, %v642
        %v645 = vrot.slane %v526, 3
        %v646 = vsel %vm572, %v645, %v644
        %v647 = vrot.slane %v527, 2
        %v648 = vsel %vm575, %v647, %v646
        %v651 = vmul.f32 %v613, %v634
        %v652 = vmul.f32 %v613, %v648
        %v653 = vmul.f32 %v614, %v634
        %v654 = vmul.f32 %v614, %v648
        %v655 = vmul.f32 %v615, %v634
        %v656 = vmul.f32 %v615, %v648
        %v657 = vmul.f32 %v616, %v634
        %v658 = vmul.f32 %v616, %v648
        %v659 = vadd.f32 %v601, %v651
        %v660 = vadd.f32 %v602, %v652
        %v661 = vadd.f32 %v603, %v653
        %v662 = vadd.f32 %v604, %v654
        %v663 = vadd.f32 %v605, %v655
        %v664 = vadd.f32 %v606, %v656
        %v665 = vadd.f32 %v607, %v657
        %v666 = vadd.f32 %v608, %v658
        %v668 = vrot.slane %v491, 1
        %v669 = vrot.slane %v491, 2
        %v670 = vrot.slane %v491, 3
        %v671 = vperm.slane %v491, 0
        %v672 = vperm.slane %v668, 0
        %v673 = vperm.slane %v669, 0
        %v674 = vperm.slane %v670, 0
        %v679 = vrot.slane %v512, 2
        %v680 = vrot.slane %v513, 1
        %v681 = vsel %vm557, %v680, %v679
        %v682 = vsel %vm560, %v514, %v681
        %v683 = vrot.slane %v515, 7
        %v684 = vsel %vm563, %v683, %v682
        %v685 = vrot.slane %v516, 6
        %v686 = vsel %vm566, %v685, %v684
        %v687 = vrot.slane %v517, 5
        %v688 = vsel %vm569, %v687, %v686
        %v689 = vrot.slane %v518, 4
        %v690 = vsel %vm572, %v689, %v688
        %v691 = vrot.slane %v519, 3
        %v692 = vsel %vm575, %v691, %v690
        %v693 = vrot.slane %v520, 2
        %v694 = vrot.slane %v521, 1
        %v695 = vsel %vm557, %v694, %v693
        %v696 = vsel %vm560, %v522, %v695
        %v697 = vrot.slane %v523, 7
        %v698 = vsel %vm563, %v697, %v696
        %v699 = vrot.slane %v524, 6
        %v700 = vsel %vm566, %v699, %v698
        %v701 = vrot.slane %v525, 5
        %v702 = vsel %vm569, %v701, %v700
        %v703 = vrot.slane %v526, 4
        %v704 = vsel %vm572, %v703, %v702
        %v705 = vrot.slane %v527, 3
        %v706 = vsel %vm575, %v705, %v704
        %v709 = vmul.f32 %v671, %v692
        %v710 = vmul.f32 %v671, %v706
        %v711 = vmul.f32 %v672, %v692
        %v712 = vmul.f32 %v672, %v706
        %v713 = vmul.f32 %v673, %v692
        %v714 = vmul.f32 %v673, %v706
        %v715 = vmul.f32 %v674, %v692
        %v716 = vmul.f32 %v674, %v706
        %v717 = vadd.f32 %v659, %v709
        %v718 = vadd.f32 %v660, %v710
        %v719 = vadd.f32 %v661, %v711
        %v720 = vadd.f32 %v662, %v712
        %v721 = vadd.f32 %v663, %v713
        %v722 = vadd.f32 %v664, %v714
        %v723 = vadd.f32 %v665, %v715
        %v724 = vadd.f32 %v666, %v716
        %v726 = vrot.slane %v492, 1
        %v727 = vrot.slane %v492, 2
        %v728 = vrot.slane %v492, 3
        %v729 = vperm.slane %v492, 0
        %v730 = vperm.slane %v726, 0
        %v731 = vperm.slane %v727, 0
        %v732 = vperm.slane %v728, 0
        %v737 = vrot.slane %v512, 3
        %v738 = vrot.slane %v513, 2
        %v739 = vsel %vm557, %v738, %v737
        %v740 = vrot.slane %v514, 1
        %v741 = vsel %vm560, %v740, %v739
        %v742 = vsel %vm563, %v515, %v741
        %v743 = vrot.slane %v516, 7
        %v744 = vsel %vm566, %v743, %v742
        %v745 = vrot.slane %v517, 6
        %v746 = vsel %vm569, %v745, %v744
        %v747 = vrot.slane %v518, 5
        %v748 = vsel %vm572, %v747, %v746
        %v749 = vrot.slane %v519, 4
        %v750 = vsel %vm575, %v749, %v748
        %v751 = vrot.slane %v520, 3
        %v752 = vrot.slane %v521, 2
        %v753 = vsel %vm557, %v752, %v751
        %v754 = vrot.slane %v522, 1
        %v755 = vsel %vm560, %v754, %v753
        %v756 = vsel %vm563, %v523, %v755
        %v757 = vrot.slane %v524, 7
        %v758 = vsel %vm566, %v757, %v756
        %v759 = vrot.slane %v525, 6
        %v760 = vsel %vm569, %v759, %v758
        %v761 = vrot.slane %v526, 5
        %v762 = vsel %vm572, %v761, %v760
        %v763 = vrot.slane %v527, 4
        %v764 = vsel %vm575, %v763, %v762
        %v767 = vmul.f32 %v729, %v750
        %v768 = vmul.f32 %v729, %v764
        %v769 = vmul.f32 %v730, %v750
        %v770 = vmul.f32 %v730, %v764
        %v771 = vmul.f32 %v731, %v750
        %v772 = vmul.f32 %v731, %v764
        %v773 = vmul.f32 %v732, %v750
        %v774 = vmul.f32 %v732, %v764
        %v775 = vadd.f32 %v717, %v767
        %v776 = vadd.f32 %v718, %v768
        %v777 = vadd.f32 %v719, %v769
        %v778 = vadd.f32 %v720, %v770
        %v779 = vadd.f32 %v721, %v771
        %v780 = vadd.f32 %v722, %v772
        %v781 = vadd.f32 %v723, %v773
        %v782 = vadd.f32 %v724, %v774
        %v784 = vrot.slane %v493, 1
        %v785 = vrot.slane %v493, 2
        %v786 = vrot.slane %v493, 3
        %v787 = vperm.slane %v493, 0
        %v788 = vperm.slane %v784, 0
        %v789 = vperm.slane %v785, 0
        %v790 = vperm.slane %v786, 0
        %v795 = vrot.slane %v512, 4
        %v796 = vrot.slane %v513, 3
        %v797 = vsel %vm557, %v796, %v795
        %v798 = vrot.slane %v514, 2
        %v799 = vsel %vm560, %v798, %v797
        %v800 = vrot.slane %v515, 1
        %v801 = vsel %vm563, %v800, %v799
        %v802 = vsel %vm566, %v516, %v801
        %v803 = vrot.slane %v517, 7
        %v804 = vsel %vm569, %v803, %v802
        %v805 = vrot.slane %v518, 6
        %v806 = vsel %vm572, %v805, %v804
        %v807 = vrot.slane %v519, 5
        %v808 = vsel %vm575, %v807, %v806
        %v809 = vrot.slane %v520, 4
        %v810 = vrot.slane %v521, 3
        %v811 = vsel %vm557, %v810, %v809
        %v812 = vrot.slane %v522, 2
        %v813 = vsel %vm560, %v812, %v811
        %v814 = vrot.slane %v523, 1
        %v815 = vsel %vm563, %v814, %v813
        %v816 = vsel %vm566, %v524, %v815
        %v817 = vrot.slane %v525, 7
        %v818 = vsel %vm569, %v817, %v816
        %v819 = vrot.slane %v526, 6
        %v820 = vsel %vm572, %v819, %v818
        %v821 = vrot.slane %v527, 5
        %v822 = vsel %vm575, %v821, %v820
        %v825 = vmul.f32 %v787, %v808
        %v826 = vmul.f32 %v787, %v822
        %v827 = vmul.f32 %v788, %v808
        %v828 = vmul.f32 %v788, %v822
        %v829 = vmul.f32 %v789, %v808
        %v830 = vmul.f32 %v789, %v822
        %v831 = vmul.f32 %v790, %v808
        %v832 = vmul.f32 %v790, %v822
        %v833 = vadd.f32 %v775, %v825
        %v834 = vadd.f32 %v776, %v826
        %v835 = vadd.f32 %v777, %v827
        %v836 = vadd.f32 %v778, %v828
        %v837 = vadd.f32 %v779, %v829
        %v838 = vadd.f32 %v780, %v830
        %v839 = vadd.f32 %v781, %v831
        %v840 = vadd.f32 %v782, %v832
        %v842 = vrot.slane %v494, 1
        %v843 = vrot.slane %v494, 2
        %v844 = vrot.slane %v494, 3
        %v845 = vperm.slane %v494, 0
        %v846 = vperm.slane %v842, 0
        %v847 = vperm.slane %v843, 0
        %v848 = vperm.slane %v844, 0
        %v853 = vrot.slane %v512, 5
        %v854 = vrot.slane %v513, 4
        %v855 = vsel %vm557, %v854, %v853
        %v856 = vrot.slane %v514, 3
        %v857 = vsel %vm560, %v856, %v855
        %v858 = vrot.slane %v515, 2
        %v859 = vsel %vm563, %v858, %v857
        %v860 = vrot.slane %v516, 1
        %v861 = vsel %vm566, %v860, %v859
        %v862 = vsel %vm569, %v517, %v861
        %v863 = vrot.slane %v518, 7
        %v864 = vsel %vm572, %v863, %v862
        %v865 = vrot.slane %v519, 6
        %v866 = vsel %vm575, %v865, %v864
        %v867 = vrot.slane %v520, 5
        %v868 = vrot.slane %v521, 4
        %v869 = vsel %vm557, %v868, %v867
        %v870 = vrot.slane %v522, 3
        %v871 = vsel %vm560, %v870, %v869
        %v872 = vrot.slane %v523, 2
        %v873 = vsel %vm563, %v872, %v871
        %v874 = vrot.slane %v524, 1
        %v875 = vsel %vm566, %v874, %v873
        %v876 = vsel %vm569, %v525, %v875
        %v877 = vrot.slane %v526, 7
        %v878 = vsel %vm572, %v877, %v876
        %v879 = vrot.slane %v527, 6
        %v880 = vsel %vm575, %v879, %v878
        %v883 = vmul.f32 %v845, %v866
        %v884 = vmul.f32 %v845, %v880
        %v885 = vmul.f32 %v846, %v866
        %v886 = vmul.f32 %v846, %v880
        %v887 = vmul.f32 %v847, %v866
        %v888 = vmul.f32 %v847, %v880
        %v889 = vmul.f32 %v848, %v866
        %v890 = vmul.f32 %v848, %v880
        %v891 = vadd.f32 %v833, %v883
        %v892 = vadd.f32 %v834, %v884
        %v893 = vadd.f32 %v835, %v885
        %v894 = vadd.f32 %v836, %v886
        %v895 = vadd.f32 %v837, %v887
        %v896 = vadd.f32 %v838, %v888
        %v897 = vadd.f32 %v839, %v889
        %v898 = vadd.f32 %v840, %v890
        %v900 = vrot.slane %v495, 1
        %v901 = vrot.slane %v495, 2
        %v902 = vrot.slane %v495, 3
        %v903 = vperm.slane %v495, 0
        %v904 = vperm.slane %v900, 0
        %v905 = vperm.slane %v901, 0
        %v906 = vperm.slane %v902, 0
        %v911 = vrot.slane %v512, 6
        %v912 = vrot.slane %v513, 5
        %v913 = vsel %vm557, %v912, %v911
        %v914 = vrot.slane %v514, 4
        %v915 = vsel %vm560, %v914, %v913
        %v916 = vrot.slane %v515, 3
        %v917 = vsel %vm563, %v916, %v915
        %v918 = vrot.slane %v516, 2
        %v919 = vsel %vm566, %v918, %v917
        %v920 = vrot.slane %v517, 1
        %v921 = vsel %vm569, %v920, %v919
        %v922 = vsel %vm572, %v518, %v921
        %v923 = vrot.slane %v519, 7
        %v924 = vsel %vm575, %v923, %v922
        %v925 = vrot.slane %v520, 6
        %v926 = vrot.slane %v521, 5
        %v927 = vsel %vm557, %v926, %v925
        %v928 = vrot.slane %v522, 4
        %v929 = vsel %vm560, %v928, %v927
        %v930 = vrot.slane %v523, 3
        %v931 = vsel %vm563, %v930, %v929
        %v932 = vrot.slane %v524, 2
        %v933 = vsel %vm566, %v932, %v931
        %v934 = vrot.slane %v525, 1
        %v935 = vsel %vm569, %v934, %v933
        %v936 = vsel %vm572, %v526, %v935
        %v937 = vrot.slane %v527, 7
        %v938 = vsel %vm575, %v937, %v936
        %v941 = vmul.f32 %v903, %v924
        %v942 = vmul.f32 %v903, %v938
        %v943 = vmul.f32 %v904, %v924
        %v944 = vmul.f32 %v904, %v938
        %v945 = vmul.f32 %v905, %v924
        %v946 = vmul.f32 %v905, %v938
        %v947 = vmul.f32 %v906, %v924
        %v948 = vmul.f32 %v906, %v938
        %v949 = vadd.f32 %v891, %v941
        %v950 = vadd.f32 %v892, %v942
        %v951 = vadd.f32 %v893, %v943
        %v952 = vadd.f32 %v894, %v944
        %v953 = vadd.f32 %v895, %v945
        %v954 = vadd.f32 %v896, %v946
        %v955 = vadd.f32 %v897, %v947
        %v956 = vadd.f32 %v898, %v948
        %v959 = vrot.slane %v949, 1
        %v960 = vrot.slane %v949, 2
        %v961 = vrot.slane %v949, 3
        %v962 = vrot.slane %v949, 4
        %v963 = vrot.slane %v949, 5
        %v964 = vrot.slane %v949, 6
        %v965 = vrot.slane %v949, 7
        %v966 = vrot.slane %v950, 1
        %v967 = vrot.slane %v950, 2
        %v968 = vrot.slane %v950, 3
        %v969 = vrot.slane %v950, 4
        %v970 = vrot.slane %v950, 5
        %v971 = vrot.slane %v950, 6
        %v972 = vrot.slane %v950, 7
        %v973 = vperm.slane %v949, 0
        %v974 = vperm.slane %v959, 0
        %v975 = vperm.slane %v960, 0
        %v976 = vperm.slane %v961, 0
        %v977 = vperm.slane %v962, 0
        %v978 = vperm.slane %v963, 0
        %v979 = vperm.slane %v964, 0
        %v980 = vperm.slane %v965, 0
        %v981 = vperm.slane %v950, 0
        %v982 = vperm.slane %v966, 0
        %v983 = vperm.slane %v967, 0
        %v984 = vperm.slane %v968, 0
        %v985 = vperm.slane %v969, 0
        %v986 = vperm.slane %v970, 0
        %v987 = vperm.slane %v971, 0
        %v988 = vperm.slane %v972, 0
        %v1005 = vmul.f32 %v973, %v496
        %v1006 = vmul.f32 %v973, %v497
        %v1007 = vmul.f32 %v973, %v498
        %v1008 = vmul.f32 %v973, %v499
        %v1009 = vmul.f32 %v974, %v496
        %v1010 = vmul.f32 %v974, %v497
        %v1011 = vmul.f32 %v974, %v498
        %v1012 = vmul.f32 %v974, %v499
        %v1013 = vmul.f32 %v975, %v496
        %v1014 = vmul.f32 %v975, %v497
        %v1015 = vmul.f32 %v975, %v498
        %v1016 = vmul.f32 %v975, %v499
        %v1017 = vmul.f32 %v976, %v496
        %v1018 = vmul.f32 %v976, %v497
        %v1019 = vmul.f32 %v976, %v498
        %v1020 = vmul.f32 %v976, %v499
        %v1021 = vmul.f32 %v977, %v496
        %v1022 = vmul.f32 %v977, %v497
        %v1023 = vmul.f32 %v977, %v498
        %v1024 = vmul.f32 %v977, %v499
        %v1025 = vmul.f32 %v978, %v496
        %v1026 = vmul.f32 %v978, %v497
        %v1027 = vmul.f32 %v978, %v498
        %v1028 = vmul.f32 %v978, %v499
        %v1029 = vmul.f32 %v979, %v496
        %v1030 = vmul.f32 %v979, %v497
        %v1031 = vmul.f32 %v979, %v498
        %v1032 = vmul.f32 %v979, %v499
        %v1033 = vmul.f32 %v980, %v496
        %v1034 = vmul.f32 %v980, %v497
        %v1035 = vmul.f32 %v980, %v498
        %v1036 = vmul.f32 %v980, %v499
        %v1037 = vmul.f32 %v981, %v496
        %v1038 = vmul.f32 %v981, %v497
        %v1039 = vmul.f32 %v981, %v498
        %v1040 = vmul.f32 %v981, %v499
        %v1041 = vmul.f32 %v982, %v496
        %v1042 = vmul.f32 %v982, %v497
        %v1043 = vmul.f32 %v982, %v498
        %v1044 = vmul.f32 %v982, %v499
        %v1045 = vmul.f32 %v983, %v496
        %v1046 = vmul.f32 %v983, %v497
        %v1047 = vmul.f32 %v983, %v498
        %v1048 = vmul.f32 %v983, %v499
        %v1049 = vmul.f32 %v984, %v496
        %v1050 = vmul.f32 %v984, %v497
        %v1051 = vmul.f32 %v984, %v498
        %v1052 = vmul.f32 %v984, %v499
        %v1053 = vmul.f32 %v985, %v496
        %v1054 = vmul.f32 %v985, %v497
        %v1055 = vmul.f32 %v985, %v498
        %v1056 = vmul.f32 %v985, %v499
        %v1057 = vmul.f32 %v986, %v496
        %v1058 = vmul.f32 %v986, %v497
        %v1059 = vmul.f32 %v986, %v498
        %v1060 = vmul.f32 %v986, %v499
        %v1061 = vmul.f32 %v987, %v496
        %v1062 = vmul.f32 %v987, %v497
        %v1063 = vmul.f32 %v987, %v498
        %v1064 = vmul.f32 %v987, %v499
        %v1065 = vmul.f32 %v988, %v496
        %v1066 = vmul.f32 %v988, %v497
        %v1067 = vmul.f32 %v988, %v498
        %v1068 = vmul.f32 %v988, %v499
        %v1069 = vadd.f32 %v1005, 0.0
        %v1070 = vadd.f32 %v1006, 0.0
        %v1071 = vadd.f32 %v1007, 0.0
        %v1072 = vadd.f32 %v1008, 0.0
        %v1073 = vadd.f32 %v1009, 0.0
        %v1074 = vadd.f32 %v1010, 0.0
        %v1075 = vadd.f32 %v1011, 0.0
        %v1076 = vadd.f32 %v1012, 0.0
        %v1077 = vadd.f32 %v1013, 0.0
        %v1078 = vadd.f32 %v1014, 0.0
        %v1079 = vadd.f32 %v1015, 0.0
        %v1080 = vadd.f32 %v1016, 0.0
        %v1081 = vadd.f32 %v1017, 0.0
        %v1082 = vadd.f32 %v1018, 0.0
        %v1083 = vadd.f32 %v1019, 0.0
        %v1084 = vadd.f32 %v1020, 0.0
        %v1085 = vadd.f32 %v1021, 0.0
        %v1086 = vadd.f32 %v1022, 0.0
        %v1087 = vadd.f32 %v1023, 0.0
        %v1088 = vadd.f32 %v1024, 0.0
        %v1089 = vadd.f32 %v1025, 0.0
        %v1090 = vadd.f32 %v1026, 0.0
        %v1091 = vadd.f32 %v1027, 0.0
        %v1092 = vadd.f32 %v1028, 0.0
        %v1093 = vadd.f32 %v1029, 0.0
        %v1094 = vadd.f32 %v1030, 0.0
        %v1095 = vadd.f32 %v1031, 0.0
        %v1096 = vadd.f32 %v1032, 0.0
        %v1097 = vadd.f32 %v1033, 0.0
        %v1098 = vadd.f32 %v1034, 0.0
        %v1099 = vadd.f32 %v1035, 0.0
        %v1100 = vadd.f32 %v1036, 0.0
        %v1101 = vadd.f32 %v1037, 0.0
        %v1102 = vadd.f32 %v1038, 0.0
        %v1103 = vadd.f32 %v1039, 0.0
        %v1104 = vadd.f32 %v1040, 0.0
        %v1105 = vadd.f32 %v1041, 0.0
        %v1106 = vadd.f32 %v1042, 0.0
        %v1107 = vadd.f32 %v1043, 0.0
        %v1108 = vadd.f32 %v1044, 0.0
        %v1109 = vadd.f32 %v1045, 0.0
        %v1110 = vadd.f32 %v1046, 0.0
        %v1111 = vadd.f32 %v1047, 0.0
        %v1112 = vadd.f32 %v1048, 0.0
        %v1113 = vadd.f32 %v1049, 0.0
        %v1114 = vadd.f32 %v1050, 0.0
        %v1115 = vadd.f32 %v1051, 0.0
        %v1116 = vadd.f32 %v1052, 0.0
        %v1117 = vadd.f32 %v1053, 0.0
        %v1118 = vadd.f32 %v1054, 0.0
        %v1119 = vadd.f32 %v1055, 0.0
        %v1120 = vadd.f32 %v1056, 0.0
        %v1121 = vadd.f32 %v1057, 0.0
        %v1122 = vadd.f32 %v1058, 0.0
        %v1123 = vadd.f32 %v1059, 0.0
        %v1124 = vadd.f32 %v1060, 0.0
        %v1125 = vadd.f32 %v1061, 0.0
        %v1126 = vadd.f32 %v1062, 0.0
        %v1127 = vadd.f32 %v1063, 0.0
        %v1128 = vadd.f32 %v1064, 0.0
        %v1129 = vadd.f32 %v1065, 0.0
        %v1130 = vadd.f32 %v1066, 0.0
        %v1131 = vadd.f32 %v1067, 0.0
        %v1132 = vadd.f32 %v1068, 0.0
        %v1135 = vrot.slane %v951, 1
        %v1136 = vrot.slane %v951, 2
        %v1137 = vrot.slane %v951, 3
        %v1138 = vrot.slane %v951, 4
        %v1139 = vrot.slane %v951, 5
        %v1140 = vrot.slane %v951, 6
        %v1141 = vrot.slane %v951, 7
        %v1142 = vrot.slane %v952, 1
        %v1143 = vrot.slane %v952, 2
        %v1144 = vrot.slane %v952, 3
        %v1145 = vrot.slane %v952, 4
        %v1146 = vrot.slane %v952, 5
        %v1147 = vrot.slane %v952, 6
        %v1148 = vrot.slane %v952, 7
        %v1149 = vperm.slane %v951, 0
        %v1150 = vperm.slane %v1135, 0
        %v1151 = vperm.slane %v1136, 0
        %v1152 = vperm.slane %v1137, 0
        %v1153 = vperm.slane %v1138, 0
        %v1154 = vperm.slane %v1139, 0
        %v1155 = vperm.slane %v1140, 0
        %v1156 = vperm.slane %v1141, 0
        %v1157 = vperm.slane %v952, 0
        %v1158 = vperm.slane %v1142, 0
        %v1159 = vperm.slane %v1143, 0
        %v1160 = vperm.slane %v1144, 0
        %v1161 = vperm.slane %v1145, 0
        %v1162 = vperm.slane %v1146, 0
        %v1163 = vperm.slane %v1147, 0
        %v1164 = vperm.slane %v1148, 0
        %v1181 = vmul.f32 %v1149, %v500
        %v1182 = vmul.f32 %v1149, %v501
        %v1183 = vmul.f32 %v1149, %v502
        %v1184 = vmul.f32 %v1149, %v503
        %v1185 = vmul.f32 %v1150, %v500
        %v1186 = vmul.f32 %v1150, %v501
        %v1187 = vmul.f32 %v1150, %v502
        %v1188 = vmul.f32 %v1150, %v503
        %v1189 = vmul.f32 %v1151, %v500
        %v1190 = vmul.f32 %v1151, %v501
        %v1191 = vmul.f32 %v1151, %v502
        %v1192 = vmul.f32 %v1151, %v503
        %v1193 = vmul.f32 %v1152, %v500
        %v1194 = vmul.f32 %v1152, %v501
        %v1195 = vmul.f32 %v1152, %v502
        %v1196 = vmul.f32 %v1152, %v503
        %v1197 = vmul.f32 %v1153, %v500
        %v1198 = vmul.f32 %v1153, %v501
        %v1199 = vmul.f32 %v1153, %v502
        %v1200 = vmul.f32 %v1153, %v503
        %v1201 = vmul.f32 %v1154, %v500
        %v1202 = vmul.f32 %v1154, %v501
        %v1203 = vmul.f32 %v1154, %v502
        %v1204 = vmul.f32 %v1154, %v503
        %v1205 = vmul.f32 %v1155, %v500
        %v1206 = vmul.f32 %v1155, %v501
        %v1207 = vmul.f32 %v1155, %v502
        %v1208 = vmul.f32 %v1155, %v503
        %v1209 = vmul.f32 %v1156, %v500
        %v1210 = vmul.f32 %v1156, %v501
        %v1211 = vmul.f32 %v1156, %v502
        %v1212 = vmul.f32 %v1156, %v503
        %v1213 = vmul.f32 %v1157, %v500
        %v1214 = vmul.f32 %v1157, %v501
        %v1215 = vmul.f32 %v1157, %v502
        %v1216 = vmul.f32 %v1157, %v503
        %v1217 = vmul.f32 %v1158, %v500
        %v1218 = vmul.f32 %v1158, %v501
        %v1219 = vmul.f32 %v1158, %v502
        %v1220 = vmul.f32 %v1158, %v503
        %v1221 = vmul.f32 %v1159, %v500
        %v1222 = vmul.f32 %v1159, %v501
        %v1223 = vmul.f32 %v1159, %v502
        %v1224 = vmul.f32 %v1159, %v503
        %v1225 = vmul.f32 %v1160, %v500
        %v1226 = vmul.f32 %v1160, %v501
        %v1227 = vmul.f32 %v1160, %v502
        %v1228 = vmul.f32 %v1160, %v503
        %v1229 = vmul.f32 %v1161, %v500
        %v1230 = vmul.f32 %v1161, %v501
        %v1231 = vmul.f32 %v1161, %v502
        %v1232 = vmul.f32 %v1161, %v503
        %v1233 = vmul.f32 %v1162, %v500
        %v1234 = vmul.f32 %v1162, %v501
        %v1235 = vmul.f32 %v1162, %v502
        %v1236 = vmul.f32 %v1162, %v503
        %v1237 = vmul.f32 %v1163, %v500
        %v1238 = vmul.f32 %v1163, %v501
        %v1239 = vmul.f32 %v1163, %v502
        %v1240 = vmul.f32 %v1163, %v503
        %v1241 = vmul.f32 %v1164, %v500
        %v1242 = vmul.f32 %v1164, %v501
        %v1243 = vmul.f32 %v1164, %v502
        %v1244 = vmul.f32 %v1164, %v503
        %v1245 = vadd.f32 %v1069, %v1181
        %v1246 = vadd.f32 %v1070, %v1182
        %v1247 = vadd.f32 %v1071, %v1183
        %v1248 = vadd.f32 %v1072, %v1184
        %v1249 = vadd.f32 %v1073, %v1185
        %v1250 = vadd.f32 %v1074, %v1186
        %v1251 = vadd.f32 %v1075, %v1187
        %v1252 = vadd.f32 %v1076, %v1188
        %v1253 = vadd.f32 %v1077, %v1189
        %v1254 = vadd.f32 %v1078, %v1190
        %v1255 = vadd.f32 %v1079, %v1191
        %v1256 = vadd.f32 %v1080, %v1192
        %v1257 = vadd.f32 %v1081, %v1193
        %v1258 = vadd.f32 %v1082, %v1194
        %v1259 = vadd.f32 %v1083, %v1195
        %v1260 = vadd.f32 %v1084, %v1196
        %v1261 = vadd.f32 %v1085, %v1197
        %v1262 = vadd.f32 %v1086, %v1198
        %v1263 = vadd.f32 %v1087, %v1199
        %v1264 = vadd.f32 %v1088, %v1200
        %v1265 = vadd.f32 %v1089, %v1201
        %v1266 = vadd.f32 %v1090, %v1202
        %v1267 = vadd.f32 %v1091, %v1203
        %v1268 = vadd.f32 %v1092, %v1204
        %v1269 = vadd.f32 %v1093, %v1205
        %v1270 = vadd.f32 %v1094, %v1206
        %v1271 = vadd.f32 %v1095, %v1207
        %v1272 = vadd.f32 %v1096, %v1208
        %v1273 = vadd.f32 %v1097, %v1209
        %v1274 = vadd.f32 %v1098, %v1210
        %v1275 = vadd.f32 %v1099, %v1211
        %v1276 = vadd.f32 %v1100, %v1212
        %v1277 = vadd.f32 %v1101, %v1213
        %v1278 = vadd.f32 %v1102, %v1214
        %v1279 = vadd.f32 %v1103, %v1215
        %v1280 = vadd.f32 %v1104, %v1216
        %v1281 = vadd.f32 %v1105, %v1217
        %v1282 = vadd.f32 %v1106, %v1218
        %v1283 = vadd.f32 %v1107, %v1219
        %v1284 = vadd.f32 %v1108, %v1220
        %v1285 = vadd.f32 %v1109, %v1221
        %v1286 = vadd.f32 %v1110, %v1222
        %v1287 = vadd.f32 %v1111, %v1223
        %v1288 = vadd.f32 %v1112, %v1224
        %v1289 = vadd.f32 %v1113, %v1225
        %v1290 = vadd.f32 %v1114, %v1226
        %v1291 = vadd.f32 %v1115, %v1227
        %v1292 = vadd.f32 %v1116, %v1228
        %v1293 = vadd.f32 %v1117, %v1229
        %v1294 = vadd.f32 %v1118, %v1230
        %v1295 = vadd.f32 %v1119, %v1231
        %v1296 = vadd.f32 %v1120, %v1232
        %v1297 = vadd.f32 %v1121, %v1233
        %v1298 = vadd.f32 %v1122, %v1234
        %v1299 = vadd.f32 %v1123, %v1235
        %v1300 = vadd.f32 %v1124, %v1236
        %v1301 = vadd.f32 %v1125, %v1237
        %v1302 = vadd.f32 %v1126, %v1238
        %v1303 = vadd.f32 %v1127, %v1239
        %v1304 = vadd.f32 %v1128, %v1240
        %v1305 = vadd.f32 %v1129, %v1241
        %v1306 = vadd.f32 %v1130, %v1242
        %v1307 = vadd.f32 %v1131, %v1243
        %v1308 = vadd.f32 %v1132, %v1244
        %v1311 = vrot.slane %v953, 1
        %v1312 = vrot.slane %v953, 2
        %v1313 = vrot.slane %v953, 3
        %v1314 = vrot.slane %v953, 4
        %v1315 = vrot.slane %v953, 5
        %v1316 = vrot.slane %v953, 6
        %v1317 = vrot.slane %v953, 7
        %v1318 = vrot.slane %v954, 1
        %v1319 = vrot.slane %v954, 2
        %v1320 = vrot.slane %v954, 3
        %v1321 = vrot.slane %v954, 4
        %v1322 = vrot.slane %v954, 5
        %v1323 = vrot.slane %v954, 6
        %v1324 = vrot.slane %v954, 7
        %v1325 = vperm.slane %v953, 0
        %v1326 = vperm.slane %v1311, 0
        %v1327 = vperm.slane %v1312, 0
        %v1328 = vperm.slane %v1313, 0
        %v1329 = vperm.slane %v1314, 0
        %v1330 = vperm.slane %v1315, 0
        %v1331 = vperm.slane %v1316, 0
        %v1332 = vperm.slane %v1317, 0
        %v1333 = vperm.slane %v954, 0
        %v1334 = vperm.slane %v1318, 0
        %v1335 = vperm.slane %v1319, 0
        %v1336 = vperm.slane %v1320, 0
        %v1337 = vperm.slane %v1321, 0
        %v1338 = vperm.slane %v1322, 0
        %v1339 = vperm.slane %v1323, 0
        %v1340 = vperm.slane %v1324, 0
        %v1357 = vmul.f32 %v1325, %v504
        %v1358 = vmul.f32 %v1325, %v505
        %v1359 = vmul.f32 %v1325, %v506
        %v1360 = vmul.f32 %v1325, %v507
        %v1361 = vmul.f32 %v1326, %v504
        %v1362 = vmul.f32 %v1326, %v505
        %v1363 = vmul.f32 %v1326, %v506
        %v1364 = vmul.f32 %v1326, %v507
        %v1365 = vmul.f32 %v1327, %v504
        %v1366 = vmul.f32 %v1327, %v505
        %v1367 = vmul.f32 %v1327, %v506
        %v1368 = vmul.f32 %v1327, %v507
        %v1369 = vmul.f32 %v1328, %v504
        %v1370 = vmul.f32 %v1328, %v505
        %v1371 = vmul.f32 %v1328, %v506
        %v1372 = vmul.f32 %v1328, %v507
        %v1373 = vmul.f32 %v1329, %v504
        %v1374 = vmul.f32 %v1329, %v505
        %v1375 = vmul.f32 %v1329, %v506
        %v1376 = vmul.f32 %v1329, %v507
        %v1377 = vmul.f32 %v1330, %v504
        %v1378 = vmul.f32 %v1330, %v505
        %v1379 = vmul.f32 %v1330, %v506
        %v1380 = vmul.f32 %v1330, %v507
        %v1381 = vmul.f32 %v1331, %v504
        %v1382 = vmul.f32 %v1331, %v505
        %v1383 = vmul.f32 %v1331, %v506
        %v1384 = vmul.f32 %v1331, %v507
        %v1385 = vmul.f32 %v1332, %v504
        %v1386 = vmul.f32 %v1332, %v505
        %v1387 = vmul.f32 %v1332, %v506
        %v1388 = vmul.f32 %v1332, %v507
        %v1389 = vmul.f32 %v1333, %v504
        %v1390 = vmul.f32 %v1333, %v505
        %v1391 = vmul.f32 %v1333, %v506
        %v1392 = vmul.f32 %v1333, %v507
        %v1393 = vmul.f32 %v1334, %v504
        %v1394 = vmul.f32 %v1334, %v505
        %v1395 = vmul.f32 %v1334, %v506
        %v1396 = vmul.f32 %v1334, %v507
        %v1397 = vmul.f32 %v1335, %v504
        %v1398 = vmul.f32 %v1335, %v505
        %v1399 = vmul.f32 %v1335, %v506
        %v1400 = vmul.f32 %v1335, %v507
        %v1401 = vmul.f32 %v1336, %v504
        %v1402 = vmul.f32 %v1336, %v505
        %v1403 = vmul.f32 %v1336, %v506
        %v1404 = vmul.f32 %v1336, %v507
        %v1405 = vmul.f32 %v1337, %v504
        %v1406 = vmul.f32 %v1337, %v505
        %v1407 = vmul.f32 %v1337, %v506
        %v1408 = vmul.f32 %v1337, %v507
        %v1409 = vmul.f32 %v1338, %v504
        %v1410 = vmul.f32 %v1338, %v505
        %v1411 = vmul.f32 %v1338, %v506
        %v1412 = vmul.f32 %v1338, %v507
        %v1413 = vmul.f32 %v1339, %v504
        %v1414 = vmul.f32 %v1339, %v505
        %v1415 = vmul.f32 %v1339, %v506
        %v1416 = vmul.f32 %v1339, %v507
        %v1417 = vmul.f32 %v1340, %v504
        %v1418 = vmul.f32 %v1340, %v505
        %v1419 = vmul.f32 %v1340, %v506
        %v1420 = vmul.f32 %v1340, %v507
        %v1421 = vadd.f32 %v1245, %v1357
        %v1422 = vadd.f32 %v1246, %v1358
        %v1423 = vadd.f32 %v1247, %v1359
        %v1424 = vadd.f32 %v1248, %v1360
        %v1425 = vadd.f32 %v1249, %v1361
        %v1426 = vadd.f32 %v1250, %v1362
        %v1427 = vadd.f32 %v1251, %v1363
        %v1428 = vadd.f32 %v1252, %v1364
        %v1429 = vadd.f32 %v1253, %v1365
        %v1430 = vadd.f32 %v1254, %v1366
        %v1431 = vadd.f32 %v1255, %v1367
        %v1432 = vadd.f32 %v1256, %v1368
        %v1433 = vadd.f32 %v1257, %v1369
        %v1434 = vadd.f32 %v1258, %v1370
        %v1435 = vadd.f32 %v1259, %v1371
        %v1436 = vadd.f32 %v1260, %v1372
        %v1437 = vadd.f32 %v1261, %v1373
        %v1438 = vadd.f32 %v1262, %v1374
        %v1439 = vadd.f32 %v1263, %v1375
        %v1440 = vadd.f32 %v1264, %v1376
        %v1441 = vadd.f32 %v1265, %v1377
        %v1442 = vadd.f32 %v1266, %v1378
        %v1443 = vadd.f32 %v1267, %v1379
        %v1444 = vadd.f32 %v1268, %v1380
        %v1445 = vadd.f32 %v1269, %v1381
        %v1446 = vadd.f32 %v1270, %v1382
        %v1447 = vadd.f32 %v1271, %v1383
        %v1448 = vadd.f32 %v1272, %v1384
        %v1449 = vadd.f32 %v1273, %v1385
        %v1450 = vadd.f32 %v1274, %v1386
        %v1451 = vadd.f32 %v1275, %v1387
        %v1452 = vadd.f32 %v1276, %v1388
        %v1453 = vadd.f32 %v1277, %v1389
        %v1454 = vadd.f32 %v1278, %v1390
        %v1455 = vadd.f32 %v1279, %v1391
        %v1456 = vadd.f32 %v1280, %v1392
        %v1457 = vadd.f32 %v1281, %v1393
        %v1458 = vadd.f32 %v1282, %v1394
        %v1459 = vadd.f32 %v1283, %v1395
        %v1460 = vadd.f32 %v1284, %v1396
        %v1461 = vadd.f32 %v1285, %v1397
        %v1462 = vadd.f32 %v1286, %v1398
        %v1463 = vadd.f32 %v1287, %v1399
        %v1464 = vadd.f32 %v1288, %v1400
        %v1465 = vadd.f32 %v1289, %v1401
        %v1466 = vadd.f32 %v1290, %v1402
        %v1467 = vadd.f32 %v1291, %v1403
        %v1468 = vadd.f32 %v1292, %v1404
        %v1469 = vadd.f32 %v1293, %v1405
        %v1470 = vadd.f32 %v1294, %v1406
        %v1471 = vadd.f32 %v1295, %v1407
        %v1472 = vadd.f32 %v1296, %v1408
        %v1473 = vadd.f32 %v1297, %v1409
        %v1474 = vadd.f32 %v1298, %v1410
        %v1475 = vadd.f32 %v1299, %v1411
        %v1476 = vadd.f32 %v1300, %v1412
        %v1477 = vadd.f32 %v1301, %v1413
        %v1478 = vadd.f32 %v1302, %v1414
        %v1479 = vadd.f32 %v1303, %v1415
        %v1480 = vadd.f32 %v1304, %v1416
        %v1481 = vadd.f32 %v1305, %v1417
        %v1482 = vadd.f32 %v1306, %v1418
        %v1483 = vadd.f32 %v1307, %v1419
        %v1484 = vadd.f32 %v1308, %v1420
        %v1487 = vrot.slane %v955, 1
        %v1488 = vrot.slane %v955, 2
        %v1489 = vrot.slane %v955, 3
        %v1490 = vrot.slane %v955, 4
        %v1491 = vrot.slane %v955, 5
        %v1492 = vrot.slane %v955, 6
        %v1493 = vrot.slane %v955, 7
        %v1494 = vrot.slane %v956, 1
        %v1495 = vrot.slane %v956, 2
        %v1496 = vrot.slane %v956, 3
        %v1497 = vrot.slane %v956, 4
        %v1498 = vrot.slane %v956, 5
        %v1499 = vrot.slane %v956, 6
        %v1500 = vrot.slane %v956, 7
        %v1501 = vperm.slane %v955, 0
        %v1502 = vperm.slane %v1487, 0
        %v1503 = vperm.slane %v1488, 0
        %v1504 = vperm.slane %v1489, 0
        %v1505 = vperm.slane %v1490, 0
        %v1506 = vperm.slane %v1491, 0
        %v1507 = vperm.slane %v1492, 0
        %v1508 = vperm.slane %v1493, 0
        %v1509 = vperm.slane %v956, 0
        %v1510 = vperm.slane %v1494, 0
        %v1511 = vperm.slane %v1495, 0
        %v1512 = vperm.slane %v1496, 0
        %v1513 = vperm.slane %v1497, 0
        %v1514 = vperm.slane %v1498, 0
        %v1515 = vperm.slane %v1499, 0
        %v1516 = vperm.slane %v1500, 0
        %v1533 = vmul.f32 %v1501, %v508
        %v1534 = vmul.f32 %v1501, %v509
        %v1535 = vmul.f32 %v1501, %v510
        %v1536 = vmul.f32 %v1501, %v511
        %v1537 = vmul.f32 %v1502, %v508
        %v1538 = vmul.f32 %v1502, %v509
        %v1539 = vmul.f32 %v1502, %v510
        %v1540 = vmul.f32 %v1502, %v511
        %v1541 = vmul.f32 %v1503, %v508
        %v1542 = vmul.f32 %v1503, %v509
        %v1543 = vmul.f32 %v1503, %v510
        %v1544 = vmul.f32 %v1503, %v511
        %v1545 = vmul.f32 %v1504, %v508
        %v1546 = vmul.f32 %v1504, %v509
        %v1547 = vmul.f32 %v1504, %v510
        %v1548 = vmul.f32 %v1504, %v511
        %v1549 = vmul.f32 %v1505, %v508
        %v1550 = vmul.f32 %v1505, %v509
        %v1551 = vmul.f32 %v1505, %v510
        %v1552 = vmul.f32 %v1505, %v511
        %v1553 = vmul.f32 %v1506, %v508
        %v1554 = vmul.f32 %v1506, %v509
        %v1555 = vmul.f32 %v1506, %v510
        %v1556 = vmul.f32 %v1506, %v511
        %v1557 = vmul.f32 %v1507, %v508
        %v1558 = vmul.f32 %v1507, %v509
        %v1559 = vmul.f32 %v1507, %v510
        %v1560 = vmul.f32 %v1507, %v511
        %v1561 = vmul.f32 %v1508, %v508
        %v1562 = vmul.f32 %v1508, %v509
        %v1563 = vmul.f32 %v1508, %v510
        %v1564 = vmul.f32 %v1508, %v511
        %v1565 = vmul.f32 %v1509, %v508
        %v1566 = vmul.f32 %v1509, %v509
        %v1567 = vmul.f32 %v1509, %v510
        %v1568 = vmul.f32 %v1509, %v511
        %v1569 = vmul.f32 %v1510, %v508
        %v1570 = vmul.f32 %v1510, %v509
        %v1571 = vmul.f32 %v1510, %v510
        %v1572 = vmul.f32 %v1510, %v511
        %v1573 = vmul.f32 %v1511, %v508
        %v1574 = vmul.f32 %v1511, %v509
        %v1575 = vmul.f32 %v1511, %v510
        %v1576 = vmul.f32 %v1511, %v511
        %v1577 = vmul.f32 %v1512, %v508
        %v1578 = vmul.f32 %v1512, %v509
        %v1579 = vmul.f32 %v1512, %v510
        %v1580 = vmul.f32 %v1512, %v511
        %v1581 = vmul.f32 %v1513, %v508
        %v1582 = vmul.f32 %v1513, %v509
        %v1583 = vmul.f32 %v1513, %v510
        %v1584 = vmul.f32 %v1513, %v511
        %v1585 = vmul.f32 %v1514, %v508
        %v1586 = vmul.f32 %v1514, %v509
        %v1587 = vmul.f32 %v1514, %v510
        %v1588 = vmul.f32 %v1514, %v511
        %v1589 = vmul.f32 %v1515, %v508
        %v1590 = vmul.f32 %v1515, %v509
        %v1591 = vmul.f32 %v1515, %v510
        %v1592 = vmul.f32 %v1515, %v511
        %v1593 = vmul.f32 %v1516, %v508
        %v1594 = vmul.f32 %v1516, %v509
        %v1595 = vmul.f32 %v1516, %v510
        %v1596 = vmul.f32 %v1516, %v511
        %v1597 = vadd.f32 %v1421, %v1533
        %v1598 = vadd.f32 %v1422, %v1534
        %v1599 = vadd.f32 %v1423, %v1535
        %v1600 = vadd.f32 %v1424, %v1536
        %v1601 = vadd.f32 %v1425, %v1537
        %v1602 = vadd.f32 %v1426, %v1538
        %v1603 = vadd.f32 %v1427, %v1539
        %v1604 = vadd.f32 %v1428, %v1540
        %v1605 = vadd.f32 %v1429, %v1541
        %v1606 = vadd.f32 %v1430, %v1542
        %v1607 = vadd.f32 %v1431, %v1543
        %v1608 = vadd.f32 %v1432, %v1544
        %v1609 = vadd.f32 %v1433, %v1545
        %v1610 = vadd.f32 %v1434, %v1546
        %v1611 = vadd.f32 %v1435, %v1547
        %v1612 = vadd.f32 %v1436, %v1548
        %v1613 = vadd.f32 %v1437, %v1549
        %v1614 = vadd.f32 %v1438, %v1550
        %v1615 = vadd.f32 %v1439, %v1551
        %v1616 = vadd.f32 %v1440, %v1552
        %v1617 = vadd.f32 %v1441, %v1553
        %v1618 = vadd.f32 %v1442, %v1554
        %v1619 = vadd.f32 %v1443, %v1555
        %v1620 = vadd.f32 %v1444, %v1556
        %v1621 = vadd.f32 %v1445, %v1557
        %v1622 = vadd.f32 %v1446, %v1558
        %v1623 = vadd.f32 %v1447, %v1559
        %v1624 = vadd.f32 %v1448, %v1560
        %v1625 = vadd.f32 %v1449, %v1561
        %v1626 = vadd.f32 %v1450, %v1562
        %v1627 = vadd.f32 %v1451, %v1563
        %v1628 = vadd.f32 %v1452, %v1564
        %v1629 = vadd.f32 %v1453, %v1565
        %v1630 = vadd.f32 %v1454, %v1566
        %v1631 = vadd.f32 %v1455, %v1567
        %v1632 = vadd.f32 %v1456, %v1568
        %v1633 = vadd.f32 %v1457, %v1569
        %v1634 = vadd.f32 %v1458, %v1570
        %v1635 = vadd.f32 %v1459, %v1571
        %v1636 = vadd.f32 %v1460, %v1572
        %v1637 = vadd.f32 %v1461, %v1573
        %v1638 = vadd.f32 %v1462, %v1574
        %v1639 = vadd.f32 %v1463, %v1575
        %v1640 = vadd.f32 %v1464, %v1576
        %v1641 = vadd.f32 %v1465, %v1577
        %v1642 = vadd.f32 %v1466, %v1578
        %v1643 = vadd.f32 %v1467, %v1579
        %v1644 = vadd.f32 %v1468, %v1580
        %v1645 = vadd.f32 %v1469, %v1581
        %v1646 = vadd.f32 %v1470, %v1582
        %v1647 = vadd.f32 %v1471, %v1583
        %v1648 = vadd.f32 %v1472, %v1584
        %v1649 = vadd.f32 %v1473, %v1585
        %v1650 = vadd.f32 %v1474, %v1586
        %v1651 = vadd.f32 %v1475, %v1587
        %v1652 = vadd.f32 %v1476, %v1588
        %v1653 = vadd.f32 %v1477, %v1589
        %v1654 = vadd.f32 %v1478, %v1590
        %v1655 = vadd.f32 %v1479, %v1591
        %v1656 = vadd.f32 %v1480, %v1592
        %v1657 = vadd.f32 %v1481, %v1593
        %v1658 = vadd.f32 %v1482, %v1594
        %v1659 = vadd.f32 %v1483, %v1595
        %v1660 = vadd.f32 %v1484, %v1596
        %v1661 = vld [vmem:[%s3] sm:$0xff]
        %v1662 = vld [vmem:[%s3 + $0x8] sm:$0xff]
        %v1663 = vld [vmem:[%s3 + $0x10] sm:$0xff]
        %v1664 = vld [vmem:[%s3 + $0x18] sm:$0xff]
        %v1665 = vld [vmem:[%s3 + $0x20] sm:$0xff]
        %v1666 = vld [vmem:[%s3 + $0x28] sm:$0xff]
        %v1667 = vld [vmem:[%s3 + $0x30] sm:$0xff]
        %v1668 = vld [vmem:[%s3 + $0x38] sm:$0xff]
        %v1669 = vld [vmem:[%s3 + $0x40] sm:$0xff]
        %v1670 = vld [vmem:[%s3 + $0x48] sm:$0xff]
        %v1671 = vld [vmem:[%s3 + $0x50] sm:$0xff]
        %v1672 = vld [vmem:[%s3 + $0x58] sm:$0xff]
        %v1673 = vld [vmem:[%s3 + $0x60] sm:$0xff]
        %v1674 = vld [vmem:[%s3 + $0x68] sm:$0xff]
        %v1675 = vld [vmem:[%s3 + $0x70] sm:$0xff]
        %v1676 = vld [vmem:[%s3 + $0x78] sm:$0xff]
        %v1677 = vld [vmem:[%s3 + $0x80] sm:$0xff]
        %v1678 = vld [vmem:[%s3 + $0x88] sm:$0xff]
        %v1679 = vld [vmem:[%s3 + $0x90] sm:$0xff]
        %v1680 = vld [vmem:[%s3 + $0x98] sm:$0xff]
        %v1681 = vld [vmem:[%s3 + $0xa0] sm:$0xff]
        %v1682 = vld [vmem:[%s3 + $0xa8] sm:$0xff]
        %v1683 = vld [vmem:[%s3 + $0xb0] sm:$0xff]
        %v1684 = vld [vmem:[%s3 + $0xb8] sm:$0xff]
        %v1685 = vld [vmem:[%s3 + $0xc0] sm:$0xff]
        %v1686 = vld [vmem:[%s3 + $0xc8] sm:$0xff]
        %v1687 = vld [vmem:[%s3 + $0xd0] sm:$0xff]
        %v1688 = vld [vmem:[%s3 + $0xd8] sm:$0xff]
        %v1689 = vld [vmem:[%s3 + $0xe0] sm:$0xff]
        %v1690 = vld [vmem:[%s3 + $0xe8] sm:$0xff]
        %v1691 = vld [vmem:[%s3 + $0xf0] sm:$0xff]
        %v1692 = vld [vmem:[%s3 + $0xf8] sm:$0xff]
        %v1693 = vld [vmem:[%s3 + $0x100] sm:$0xff]
        %v1694 = vld [vmem:[%s3 + $0x108] sm:$0xff]
        %v1695 = vld [vmem:[%s3 + $0x110] sm:$0xff]
        %v1696 = vld [vmem:[%s3 + $0x118] sm:$0xff]
        %v1697 = vld [vmem:[%s3 + $0x120] sm:$0xff]
        %v1698 = vld [vmem:[%s3 + $0x128] sm:$0xff]
        %v1699 = vld [vmem:[%s3 + $0x130] sm:$0xff]
        %v1700 = vld [vmem:[%s3 + $0x138] sm:$0xff]
        %v1701 = vld [vmem:[%s3 + $0x140] sm:$0xff]
        %v1702 = vld [vmem:[%s3 + $0x148] sm:$0xff]
        %v1703 = vld [vmem:[%s3 + $0x150] sm:$0xff]
        %v1704 = vld [vmem:[%s3 + $0x158] sm:$0xff]
        %v1705 = vld [vmem:[%s3 + $0x160] sm:$0xff]
        %v1706 = vld [vmem:[%s3 + $0x168] sm:$0xff]
        %v1707 = vld [vmem:[%s3 + $0x170] sm:$0xff]
        %v1708 = vld [vmem:[%s3 + $0x178] sm:$0xff]
        %v1709 = vld [vmem:[%s3 + $0x180] sm:$0xff]
        %v1710 = vld [vmem:[%s3 + $0x188] sm:$0xff]
        %v1711 = vld [vmem:[%s3 + $0x190] sm:$0xff]
        %v1712 = vld [vmem:[%s3 + $0x198] sm:$0xff]
        %v1713 = vld [vmem:[%s3 + $0x1a0] sm:$0xff]
        %v1714 = vld [vmem:[%s3 + $0x1a8] sm:$0xff]
        %v1715 = vld [vmem:[%s3 + $0x1b0] sm:$0xff]
        %v1716 = vld [vmem:[%s3 + $0x1b8] sm:$0xff]
        %v1717 = vld [vmem:[%s3 + $0x1c0] sm:$0xff]
        %v1718 = vld [vmem:[%s3 + $0x1c8] sm:$0xff]
        %v1719 = vld [vmem:[%s3 + $0x1d0] sm:$0xff]
        %v1720 = vld [vmem:[%s3 + $0x1d8] sm:$0xff]
        %v1721 = vld [vmem:[%s3 + $0x1e0] sm:$0xff]
        %v1722 = vld [vmem:[%s3 + $0x1e8] sm:$0xff]
        %v1723 = vld [vmem:[%s3 + $0x1f0] sm:$0xff]
        %v1724 = vld [vmem:[%s3 + $0x1f8] sm:$0xff]
        %1725 = vmatpush.msra.mxu0 %v1612
        %1726 = vmatpush.msra.mxu0 %v1611
        %1727 = vmatpush.msra.mxu0 %v1610
        %1728 = vmatpush.msra.mxu0 %v1609
        %1729 = vmatpush.msra.mxu0 %v1608
        %1730 = vmatpush.msra.mxu0 %v1607
        %1731 = vmatpush.msra.mxu0 %v1606
        %1732 = vmatpush.msra.mxu0 %v1605
        %1733 = vmatpush.msra.mxu0 %v1604
        %1734 = vmatpush.msra.mxu0 %v1603
        %1735 = vmatpush.msra.mxu0 %v1602
        %1736 = vmatpush.msra.mxu0 %v1601
        %1737 = vmatpush.msra.mxu0 %v1600
        %1738 = vmatpush.msra.mxu0 %v1599
        %1739 = vmatpush.msra.mxu0 %v1598
        %1740 = vmatpush.msra.mxu0 %v1597
        %1741 = vmatmul.f32.gmra.mxu0 %v1661
        %v1742 = vpop.f32.mrf.mxu0
        %v1743 = vadd.f32 0.0, %v1742
        %1744 = vmatmul.f32.gmra.mxu0 %v1665
        %v1745 = vpop.f32.mrf.mxu0
        %v1746 = vadd.f32 0.0, %v1745
        %1747 = vmatmul.f32.gmra.mxu0 %v1669
        %v1748 = vpop.f32.mrf.mxu0
        %v1749 = vadd.f32 0.0, %v1748
        %1750 = vmatmul.f32.gmra.mxu0 %v1673
        %v1751 = vpop.f32.mrf.mxu0
        %v1752 = vadd.f32 0.0, %v1751
        %1753 = vmatmul.f32.gmra.mxu0 %v1677
        %v1754 = vpop.f32.mrf.mxu0
        %v1755 = vadd.f32 0.0, %v1754
        %1756 = vmatmul.f32.gmra.mxu0 %v1681
        %v1757 = vpop.f32.mrf.mxu0
        %v1758 = vadd.f32 0.0, %v1757
        %1759 = vmatmul.f32.gmra.mxu0 %v1685
        %v1760 = vpop.f32.mrf.mxu0
        %v1761 = vadd.f32 0.0, %v1760
        %1762 = vmatmul.f32.gmra.mxu0 %v1689
        %v1763 = vpop.f32.mrf.mxu0
        %v1764 = vadd.f32 0.0, %v1763
        %1765 = vmatmul.f32.gmra.mxu0 %v1693
        %v1766 = vpop.f32.mrf.mxu0
        %v1767 = vadd.f32 0.0, %v1766
        %1768 = vmatmul.f32.gmra.mxu0 %v1697
        %v1769 = vpop.f32.mrf.mxu0
        %v1770 = vadd.f32 0.0, %v1769
        %1771 = vmatmul.f32.gmra.mxu0 %v1701
        %v1772 = vpop.f32.mrf.mxu0
        %v1773 = vadd.f32 0.0, %v1772
        %1774 = vmatmul.f32.gmra.mxu0 %v1705
        %v1775 = vpop.f32.mrf.mxu0
        %v1776 = vadd.f32 0.0, %v1775
        %1777 = vmatmul.f32.gmra.mxu0 %v1709
        %v1778 = vpop.f32.mrf.mxu0
        %v1779 = vadd.f32 0.0, %v1778
        %1780 = vmatmul.f32.gmra.mxu0 %v1713
        %v1781 = vpop.f32.mrf.mxu0
        %v1782 = vadd.f32 0.0, %v1781
        %1783 = vmatmul.f32.gmra.mxu0 %v1717
        %v1784 = vpop.f32.mrf.mxu0
        %v1785 = vadd.f32 0.0, %v1784
        %1786 = vmatmul.f32.gmra.mxu0 %v1721
        %v1787 = vpop.f32.mrf.mxu0
        %v1788 = vadd.f32 0.0, %v1787
        %1789 = vdwg.mxu0
        %1790 = vmatpush.msra.mxu0 %v1628
        %1791 = vmatpush.msra.mxu0 %v1627
        %1792 = vmatpush.msra.mxu0 %v1626
        %1793 = vmatpush.msra.mxu0 %v1625
        %1794 = vmatpush.msra.mxu0 %v1624
        %1795 = vmatpush.msra.mxu0 %v1623
        %1796 = vmatpush.msra.mxu0 %v1622
        %1797 = vmatpush.msra.mxu0 %v1621
        %1798 = vmatpush.msra.mxu0 %v1620
        %1799 = vmatpush.msra.mxu0 %v1619
        %1800 = vmatpush.msra.mxu0 %v1618
        %1801 = vmatpush.msra.mxu0 %v1617
        %1802 = vmatpush.msra.mxu0 %v1616
        %1803 = vmatpush.msra.mxu0 %v1615
        %1804 = vmatpush.msra.mxu0 %v1614
        %1805 = vmatpush.msra.mxu0 %v1613
        %1806 = vmatmul.f32.gmra.mxu0 %v1662
        %v1807 = vpop.f32.mrf.mxu0
        %v1808 = vadd.f32 %v1743, %v1807
        %1809 = vmatmul.f32.gmra.mxu0 %v1666
        %v1810 = vpop.f32.mrf.mxu0
        %v1811 = vadd.f32 %v1746, %v1810
        %1812 = vmatmul.f32.gmra.mxu0 %v1670
        %v1813 = vpop.f32.mrf.mxu0
        %v1814 = vadd.f32 %v1749, %v1813
        %1815 = vmatmul.f32.gmra.mxu0 %v1674
        %v1816 = vpop.f32.mrf.mxu0
        %v1817 = vadd.f32 %v1752, %v1816
        %1818 = vmatmul.f32.gmra.mxu0 %v1678
        %v1819 = vpop.f32.mrf.mxu0
        %v1820 = vadd.f32 %v1755, %v1819
        %1821 = vmatmul.f32.gmra.mxu0 %v1682
        %v1822 = vpop.f32.mrf.mxu0
        %v1823 = vadd.f32 %v1758, %v1822
        %1824 = vmatmul.f32.gmra.mxu0 %v1686
        %v1825 = vpop.f32.mrf.mxu0
        %v1826 = vadd.f32 %v1761, %v1825
        %1827 = vmatmul.f32.gmra.mxu0 %v1690
        %v1828 = vpop.f32.mrf.mxu0
        %v1829 = vadd.f32 %v1764, %v1828
        %1830 = vmatmul.f32.gmra.mxu0 %v1694
        %v1831 = vpop.f32.mrf.mxu0
        %v1832 = vadd.f32 %v1767, %v1831
        %1833 = vmatmul.f32.gmra.mxu0 %v1698
        %v1834 = vpop.f32.mrf.mxu0
        %v1835 = vadd.f32 %v1770, %v1834
        %1836 = vmatmul.f32.gmra.mxu0 %v1702
        %v1837 = vpop.f32.mrf.mxu0
        %v1838 = vadd.f32 %v1773, %v1837
        %1839 = vmatmul.f32.gmra.mxu0 %v1706
        %v1840 = vpop.f32.mrf.mxu0
        %v1841 = vadd.f32 %v1776, %v1840
        %1842 = vmatmul.f32.gmra.mxu0 %v1710
        %v1843 = vpop.f32.mrf.mxu0
        %v1844 = vadd.f32 %v1779, %v1843
        %1845 = vmatmul.f32.gmra.mxu0 %v1714
        %v1846 = vpop.f32.mrf.mxu0
        %v1847 = vadd.f32 %v1782, %v1846
        %1848 = vmatmul.f32.gmra.mxu0 %v1718
        %v1849 = vpop.f32.mrf.mxu0
        %v1850 = vadd.f32 %v1785, %v1849
        %1851 = vmatmul.f32.gmra.mxu0 %v1722
        %v1852 = vpop.f32.mrf.mxu0
        %v1853 = vadd.f32 %v1788, %v1852
        %1854 = vdwg.mxu0
        %1855 = vmatpush.msra.mxu0 %v1644
        %1856 = vmatpush.msra.mxu0 %v1643
        %1857 = vmatpush.msra.mxu0 %v1642
        %1858 = vmatpush.msra.mxu0 %v1641
        %1859 = vmatpush.msra.mxu0 %v1640
        %1860 = vmatpush.msra.mxu0 %v1639
        %1861 = vmatpush.msra.mxu0 %v1638
        %1862 = vmatpush.msra.mxu0 %v1637
        %1863 = vmatpush.msra.mxu0 %v1636
        %1864 = vmatpush.msra.mxu0 %v1635
        %1865 = vmatpush.msra.mxu0 %v1634
        %1866 = vmatpush.msra.mxu0 %v1633
        %1867 = vmatpush.msra.mxu0 %v1632
        %1868 = vmatpush.msra.mxu0 %v1631
        %1869 = vmatpush.msra.mxu0 %v1630
        %1870 = vmatpush.msra.mxu0 %v1629
        %1871 = vmatmul.f32.gmra.mxu0 %v1663
        %v1872 = vpop.f32.mrf.mxu0
        %v1873 = vadd.f32 %v1808, %v1872
        %1874 = vmatmul.f32.gmra.mxu0 %v1667
        %v1875 = vpop.f32.mrf.mxu0
        %v1876 = vadd.f32 %v1811, %v1875
        %1877 = vmatmul.f32.gmra.mxu0 %v1671
        %v1878 = vpop.f32.mrf.mxu0
        %v1879 = vadd.f32 %v1814, %v1878
        %1880 = vmatmul.f32.gmra.mxu0 %v1675
        %v1881 = vpop.f32.mrf.mxu0
        %v1882 = vadd.f32 %v1817, %v1881
        %1883 = vmatmul.f32.gmra.mxu0 %v1679
        %v1884 = vpop.f32.mrf.mxu0
        %v1885 = vadd.f32 %v1820, %v1884
        %1886 = vmatmul.f32.gmra.mxu0 %v1683
        %v1887 = vpop.f32.mrf.mxu0
        %v1888 = vadd.f32 %v1823, %v1887
        %1889 = vmatmul.f32.gmra.mxu0 %v1687
        %v1890 = vpop.f32.mrf.mxu0
        %v1891 = vadd.f32 %v1826, %v1890
        %1892 = vmatmul.f32.gmra.mxu0 %v1691
        %v1893 = vpop.f32.mrf.mxu0
        %v1894 = vadd.f32 %v1829, %v1893
        %1895 = vmatmul.f32.gmra.mxu0 %v1695
        %v1896 = vpop.f32.mrf.mxu0
        %v1897 = vadd.f32 %v1832, %v1896
        %1898 = vmatmul.f32.gmra.mxu0 %v1699
        %v1899 = vpop.f32.mrf.mxu0
        %v1900 = vadd.f32 %v1835, %v1899
        %1901 = vmatmul.f32.gmra.mxu0 %v1703
        %v1902 = vpop.f32.mrf.mxu0
        %v1903 = vadd.f32 %v1838, %v1902
        %1904 = vmatmul.f32.gmra.mxu0 %v1707
        %v1905 = vpop.f32.mrf.mxu0
        %v1906 = vadd.f32 %v1841, %v1905
        %1907 = vmatmul.f32.gmra.mxu0 %v1711
        %v1908 = vpop.f32.mrf.mxu0
        %v1909 = vadd.f32 %v1844, %v1908
        %1910 = vmatmul.f32.gmra.mxu0 %v1715
        %v1911 = vpop.f32.mrf.mxu0
        %v1912 = vadd.f32 %v1847, %v1911
        %1913 = vmatmul.f32.gmra.mxu0 %v1719
        %v1914 = vpop.f32.mrf.mxu0
        %v1915 = vadd.f32 %v1850, %v1914
        %1916 = vmatmul.f32.gmra.mxu0 %v1723
        %v1917 = vpop.f32.mrf.mxu0
        %v1918 = vadd.f32 %v1853, %v1917
        %1919 = vdwg.mxu0
        %1920 = vmatpush.msra.mxu0 %v1660
        %1921 = vmatpush.msra.mxu0 %v1659
        %1922 = vmatpush.msra.mxu0 %v1658
        %1923 = vmatpush.msra.mxu0 %v1657
        %1924 = vmatpush.msra.mxu0 %v1656
        %1925 = vmatpush.msra.mxu0 %v1655
        %1926 = vmatpush.msra.mxu0 %v1654
        %1927 = vmatpush.msra.mxu0 %v1653
        %1928 = vmatpush.msra.mxu0 %v1652
        %1929 = vmatpush.msra.mxu0 %v1651
        %1930 = vmatpush.msra.mxu0 %v1650
        %1931 = vmatpush.msra.mxu0 %v1649
        %1932 = vmatpush.msra.mxu0 %v1648
        %1933 = vmatpush.msra.mxu0 %v1647
        %1934 = vmatpush.msra.mxu0 %v1646
        %1935 = vmatpush.msra.mxu0 %v1645
        %1936 = vmatmul.f32.gmra.mxu0 %v1664
        %v1937 = vpop.f32.mrf.mxu0
        %v1938 = vadd.f32 %v1873, %v1937
        %1939 = vmatmul.f32.gmra.mxu0 %v1668
        %v1940 = vpop.f32.mrf.mxu0
        %v1941 = vadd.f32 %v1876, %v1940
        %1942 = vmatmul.f32.gmra.mxu0 %v1672
        %v1943 = vpop.f32.mrf.mxu0
        %v1944 = vadd.f32 %v1879, %v1943
        %1945 = vmatmul.f32.gmra.mxu0 %v1676
        %v1946 = vpop.f32.mrf.mxu0
        %v1947 = vadd.f32 %v1882, %v1946
        %1948 = vmatmul.f32.gmra.mxu0 %v1680
        %v1949 = vpop.f32.mrf.mxu0
        %v1950 = vadd.f32 %v1885, %v1949
        %1951 = vmatmul.f32.gmra.mxu0 %v1684
        %v1952 = vpop.f32.mrf.mxu0
        %v1953 = vadd.f32 %v1888, %v1952
        %1954 = vmatmul.f32.gmra.mxu0 %v1688
        %v1955 = vpop.f32.mrf.mxu0
        %v1956 = vadd.f32 %v1891, %v1955
        %1957 = vmatmul.f32.gmra.mxu0 %v1692
        %v1958 = vpop.f32.mrf.mxu0
        %v1959 = vadd.f32 %v1894, %v1958
        %1960 = vmatmul.f32.gmra.mxu0 %v1696
        %v1961 = vpop.f32.mrf.mxu0
        %v1962 = vadd.f32 %v1897, %v1961
        %1963 = vmatmul.f32.gmra.mxu0 %v1700
        %v1964 = vpop.f32.mrf.mxu0
        %v1965 = vadd.f32 %v1900, %v1964
        %1966 = vmatmul.f32.gmra.mxu0 %v1704
        %v1967 = vpop.f32.mrf.mxu0
        %v1968 = vadd.f32 %v1903, %v1967
        %1969 = vmatmul.f32.gmra.mxu0 %v1708
        %v1970 = vpop.f32.mrf.mxu0
        %v1971 = vadd.f32 %v1906, %v1970
        %1972 = vmatmul.f32.gmra.mxu0 %v1712
        %v1973 = vpop.f32.mrf.mxu0
        %v1974 = vadd.f32 %v1909, %v1973
        %1975 = vmatmul.f32.gmra.mxu0 %v1716
        %v1976 = vpop.f32.mrf.mxu0
        %v1977 = vadd.f32 %v1912, %v1976
        %1978 = vmatmul.f32.gmra.mxu0 %v1720
        %v1979 = vpop.f32.mrf.mxu0
        %v1980 = vadd.f32 %v1915, %v1979
        %1981 = vmatmul.f32.gmra.mxu0 %v1724
        %v1982 = vpop.f32.mrf.mxu0
        %v1983 = vadd.f32 %v1918, %v1982
        %1984 = vdwg.mxu0
        %1985 = vst [vmem:[%s488] sm:$0xff] %v1938
        %1986 = vst [vmem:[%s488 + $0x8] sm:$0xff] %v1941
        %1987 = vst [vmem:[%s488 + $0x10] sm:$0xff] %v1944
        %1988 = vst [vmem:[%s488 + $0x18] sm:$0xff] %v1947
        %1989 = vst [vmem:[%s488 + $0x20] sm:$0xff] %v1950
        %1990 = vst [vmem:[%s488 + $0x28] sm:$0xff] %v1953
        %1991 = vst [vmem:[%s488 + $0x30] sm:$0xff] %v1956
        %1992 = vst [vmem:[%s488 + $0x38] sm:$0xff] %v1959
        %1993 = vst [vmem:[%s488 + $0x40] sm:$0xff] %v1962
        %1994 = vst [vmem:[%s488 + $0x48] sm:$0xff] %v1965
        %1995 = vst [vmem:[%s488 + $0x50] sm:$0xff] %v1968
        %1996 = vst [vmem:[%s488 + $0x58] sm:$0xff] %v1971
        %1997 = vst [vmem:[%s488 + $0x60] sm:$0xff] %v1974
        %1998 = vst [vmem:[%s488 + $0x68] sm:$0xff] %v1977
        %1999 = vst [vmem:[%s488 + $0x70] sm:$0xff] %v1980
        %2000 = vst [vmem:[%s488 + $0x78] sm:$0xff] %v1983
        %s2001 = sand.u32 %s122, 1
        %s2002 = sand.u32 %s122, 1
        %s2003 = smul.addr %s2002, 128
        %s2004 = scalar_lea.vmem [#allocation5], %s2003
        // Predicated region
        $region154: #{efficient_interaction_bilinear.1} parent=140 // pred_check
          %p2005 = pneg %p132
        $region155: #{efficient_interaction_bilinear.1} parent=140 // pred_check_branch
          %2007 = sbr.rel (%p2005) target = $region157
        $region156: #{efficient_interaction_bilinear.1} parent=140 // pred_region
          %s2008 = smul.addr %s15, 8
          %s2009 = scalar_lea.vmem %s4, %s2008
          // Predicated region
          $region158: #{efficient_interaction_bilinear.1} parent=156 // pred_check
            _
          $region159: #{efficient_interaction_bilinear.1} parent=156 // pred_check_branch
            %2011 = sbr.rel (0) target = $region161
          $region160: #{efficient_interaction_bilinear.1} parent=156 // pred_region
            // Predicated region
            $region162: #{efficient_interaction_bilinear.1} parent=160 // pred_check
              _
            $region163: #{efficient_interaction_bilinear.1} parent=160 // pred_check_branch
              %2013 = sbr.rel (0) target = $region165
            $region164: #{efficient_interaction_bilinear.1} parent=160 // pred_region
              // Predicated region
              $region177: #{efficient_interaction_bilinear.1} parent=164 // pred_check
                _
              $region178: #{efficient_interaction_bilinear.1} parent=164 // pred_check_branch
                %2059 = sbr.rel (0) target = $region180
              $region179: #{efficient_interaction_bilinear.1} parent=164 // pred_region
                loop: start=0, step=1, limit=1
                $region181: #{efficient_interaction_bilinear.1} parent=179 // loop_pre_header
                  _
                $region182: #{efficient_interaction_bilinear.1} parent=179 // loop_header
                  %s2061 = sphi 0, %s2065
                  %p2062 = scmp.ge.s32.totalorder %s2061, 1
                  %s2066 = sphi %s2004, %s2004
                  %s2067 = sphi %s2009, %s2009
                $region183: #{efficient_interaction_bilinear.1} parent=179 // loop_header_branch
                  %2064 = sbr.rel (%p2062) target = $region187
                $region184: #{efficient_interaction_bilinear.1} parent=179 // loop_body
                  %v2068 = vld [vmem:[%s2066] sm:$0xff]
                  %2069 = vst [vmem:[%s2067] sm:$0xff] %v2068
                  %v2070 = vld [vmem:[%s2066 + $0x8] sm:$0xff]
                  %2071 = vst [vmem:[%s2067 + $0x10] sm:$0xff] %v2070
                  %v2072 = vld [vmem:[%s2066 + $0x10] sm:$0xff]
                  %2073 = vst [vmem:[%s2067 + $0x20] sm:$0xff] %v2072
                  %v2074 = vld [vmem:[%s2066 + $0x18] sm:$0xff]
                  %2075 = vst [vmem:[%s2067 + $0x30] sm:$0xff] %v2074
                  %v2076 = vld [vmem:[%s2066 + $0x20] sm:$0xff]
                  %2077 = vst [vmem:[%s2067 + $0x40] sm:$0xff] %v2076
                  %v2078 = vld [vmem:[%s2066 + $0x28] sm:$0xff]
                  %2079 = vst [vmem:[%s2067 + $0x50] sm:$0xff] %v2078
                  %v2080 = vld [vmem:[%s2066 + $0x30] sm:$0xff]
                  %2081 = vst [vmem:[%s2067 + $0x60] sm:$0xff] %v2080
                  %v2082 = vld [vmem:[%s2066 + $0x38] sm:$0xff]
                  %2083 = vst [vmem:[%s2067 + $0x70] sm:$0xff] %v2082
                  %v2084 = vld [vmem:[%s2066 + $0x40] sm:$0xff]
                  %2085 = vst [vmem:[%s2067 + $0x80] sm:$0xff] %v2084
                  %v2086 = vld [vmem:[%s2066 + $0x48] sm:$0xff]
                  %2087 = vst [vmem:[%s2067 + $0x90] sm:$0xff] %v2086
                  %v2088 = vld [vmem:[%s2066 + $0x50] sm:$0xff]
                  %2089 = vst [vmem:[%s2067 + $0xa0] sm:$0xff] %v2088
                  %v2090 = vld [vmem:[%s2066 + $0x58] sm:$0xff]
                  %2091 = vst [vmem:[%s2067 + $0xb0] sm:$0xff] %v2090
                  %v2092 = vld [vmem:[%s2066 + $0x60] sm:$0xff]
                  %2093 = vst [vmem:[%s2067 + $0xc0] sm:$0xff] %v2092
                  %v2094 = vld [vmem:[%s2066 + $0x68] sm:$0xff]
                  %2095 = vst [vmem:[%s2067 + $0xd0] sm:$0xff] %v2094
                  %v2096 = vld [vmem:[%s2066 + $0x70] sm:$0xff]
                  %2097 = vst [vmem:[%s2067 + $0xe0] sm:$0xff] %v2096
                  %v2098 = vld [vmem:[%s2066 + $0x78] sm:$0xff]
                  %2099 = vst [vmem:[%s2067 + $0xf0] sm:$0xff] %v2098
                $region185: #{efficient_interaction_bilinear.1} parent=179 // loop_footer
                  %s2065 = sadd.s32 1, %s2061
                $region186: #{efficient_interaction_bilinear.1} parent=179 // loop_footer_branch
                  %2060 = sbr.rel target = $region182
                $region187: #{efficient_interaction_bilinear.1} parent=179 // loop_exit
                  _
              $region180: #{efficient_interaction_bilinear.1} parent=164 // pred_fallthru
                _
              // Predicated region
              $region188: #{efficient_interaction_bilinear.1} parent=164 // pred_check
                _
              $region189: #{efficient_interaction_bilinear.1} parent=164 // pred_check_branch
                %2101 = sbr.rel target = $region191
              $region190: #{efficient_interaction_bilinear.1} parent=164 // pred_region
                _
              $region191: #{efficient_interaction_bilinear.1} parent=164 // pred_fallthru
                _
            $region165: #{efficient_interaction_bilinear.1} parent=160 // pred_fallthru
              _
            // Predicated region
            $region166: #{efficient_interaction_bilinear.1} parent=160 // pred_check
              _
            $region167: #{efficient_interaction_bilinear.1} parent=160 // pred_check_branch
              %2015 = sbr.rel target = $region169
            $region168: #{efficient_interaction_bilinear.1} parent=160 // pred_region
              %s2017 = ssub.s32 256, 1
              loop: start=0, step=1, limit=1
              $region170: #{efficient_interaction_bilinear.1} parent=168 // loop_pre_header
                _
              $region171: #{efficient_interaction_bilinear.1} parent=168 // loop_header
                %s2019 = sphi 0, %s2023
                %p2020 = scmp.ge.s32.totalorder %s2019, 1
                %s2024 = sphi %s2004, %s2004
                %s2025 = sphi %s2009, %s2009
              $region172: #{efficient_interaction_bilinear.1} parent=168 // loop_header_branch
                %2022 = sbr.rel (%p2020) target = $region176
              $region173: #{efficient_interaction_bilinear.1} parent=168 // loop_body
                %v2026 = vld [vmem:[%s2024] sm:%s2017]
                %2027 = vst [vmem:[%s2025] sm:%s2017] %v2026
                %v2028 = vld [vmem:[%s2024 + $0x8] sm:%s2017]
                %2029 = vst [vmem:[%s2025 + $0x10] sm:%s2017] %v2028
                %v2030 = vld [vmem:[%s2024 + $0x10] sm:%s2017]
                %2031 = vst [vmem:[%s2025 + $0x20] sm:%s2017] %v2030
                %v2032 = vld [vmem:[%s2024 + $0x18] sm:%s2017]
                %2033 = vst [vmem:[%s2025 + $0x30] sm:%s2017] %v2032
                %v2034 = vld [vmem:[%s2024 + $0x20] sm:%s2017]
                %2035 = vst [vmem:[%s2025 + $0x40] sm:%s2017] %v2034
                %v2036 = vld [vmem:[%s2024 + $0x28] sm:%s2017]
                %2037 = vst [vmem:[%s2025 + $0x50] sm:%s2017] %v2036
                %v2038 = vld [vmem:[%s2024 + $0x30] sm:%s2017]
                %2039 = vst [vmem:[%s2025 + $0x60] sm:%s2017] %v2038
                %v2040 = vld [vmem:[%s2024 + $0x38] sm:%s2017]
                %2041 = vst [vmem:[%s2025 + $0x70] sm:%s2017] %v2040
                %v2042 = vld [vmem:[%s2024 + $0x40] sm:%s2017]
                %2043 = vst [vmem:[%s2025 + $0x80] sm:%s2017] %v2042
                %v2044 = vld [vmem:[%s2024 + $0x48] sm:%s2017]
                %2045 = vst [vmem:[%s2025 + $0x90] sm:%s2017] %v2044
                %v2046 = vld [vmem:[%s2024 + $0x50] sm:%s2017]
                %2047 = vst [vmem:[%s2025 + $0xa0] sm:%s2017] %v2046
                %v2048 = vld [vmem:[%s2024 + $0x58] sm:%s2017]
                %2049 = vst [vmem:[%s2025 + $0xb0] sm:%s2017] %v2048
                %v2050 = vld [vmem:[%s2024 + $0x60] sm:%s2017]
                %2051 = vst [vmem:[%s2025 + $0xc0] sm:%s2017] %v2050
                %v2052 = vld [vmem:[%s2024 + $0x68] sm:%s2017]
                %2053 = vst [vmem:[%s2025 + $0xd0] sm:%s2017] %v2052
                %v2054 = vld [vmem:[%s2024 + $0x70] sm:%s2017]
                %2055 = vst [vmem:[%s2025 + $0xe0] sm:%s2017] %v2054
                %v2056 = vld [vmem:[%s2024 + $0x78] sm:%s2017]
                %2057 = vst [vmem:[%s2025 + $0xf0] sm:%s2017] %v2056
              $region174: #{efficient_interaction_bilinear.1} parent=168 // loop_footer
                %s2023 = sadd.s32 1, %s2019
              $region175: #{efficient_interaction_bilinear.1} parent=168 // loop_footer_branch
                %2018 = sbr.rel target = $region171
              $region176: #{efficient_interaction_bilinear.1} parent=168 // loop_exit
                _
            $region169: #{efficient_interaction_bilinear.1} parent=160 // pred_fallthru
              _
          $region161: #{efficient_interaction_bilinear.1} parent=156 // pred_fallthru
            _
          %2102 = vnop
        $region157: #{efficient_interaction_bilinear.1} parent=140 // pred_fallthru
          _
      $region141: #{efficient_interaction_bilinear.1} parent=5 // pred_fallthru
        _
      %p2103 = scmp.le.s32.totalorder 2, %s10
      // Predicated region
      $region192: #{efficient_interaction_bilinear.1} parent=5 // pred_check
        %p2104 = pneg %p2103
      $region193: #{efficient_interaction_bilinear.1} parent=5 // pred_check_branch
        %2106 = sbr.rel (%p2104) target = $region195
      $region194: #{efficient_interaction_bilinear.1} parent=5 // pred_region
        %s2107 = ssub.s32 %s10, 2
        // Predicated region
        $region196: #{efficient_interaction_bilinear.1} parent=194 // pred_check
          %p2108 = pneg %p138
        $region197: #{efficient_interaction_bilinear.1} parent=194 // pred_check_branch
          %2110 = sbr.rel (%p2108) target = $region199
        $region198: #{efficient_interaction_bilinear.1} parent=194 // pred_region
          %s2111 = sand.u32 %s123, 1
          %s2112 = sand.u32 %s123, 1
          %s2113 = smul.addr %s2112, 128
          %s2114 = scalar_lea.vmem [#allocation5], %s2113
        $region199: #{efficient_interaction_bilinear.1} parent=194 // pred_fallthru
          _
      $region195: #{efficient_interaction_bilinear.1} parent=5 // pred_fallthru
        _
    $region6: #{efficient_interaction_bilinear.1} parent=1 // loop_footer
      %s14 = sadd.s32 1, %s10
    $region7: #{efficient_interaction_bilinear.1} parent=1 // loop_footer_branch
      %9 = sbr.rel target = $region3
    $region8: #{efficient_interaction_bilinear.1} parent=1 // loop_exit
      _

</llo_original>
